<compile_context>
chip_gen: v5e
topology: v5e:2x2
jax: 0.10.0
libtpu: 0.0.40
codegen_flags: <defaults>
</compile_context>

<pallas_src>
import functools
import numpy as np

import jax
import jax.numpy as jnp
from jax.experimental import pallas as pl
from jax.experimental.pallas import tpu as pltpu

_PRED_LANES = 128  # lane-dense prediction output width (col0=back, col1=forward)


# ----------------------------- helpers ------------------------------------

def _vmem_spec():
    return pl.BlockSpec(memory_space=pltpu.MemorySpace.VMEM)


def _gelu_exact(x):
    # exact (erf-based) GELU, matching torch.nn.GELU() default; f32 math
    return 0.5 * x * (1.0 + jax.lax.erf(x * 0.7071067811865476))


def _ln(x, g, b, eps):
    mu = jnp.mean(x, axis=-1, keepdims=True)
    var = jnp.mean((x - mu) ** 2, axis=-1, keepdims=True)
    return (x - mu) * jax.lax.rsqrt(var + eps) * g + b


# --------------------- fused whole-encoder kernel ---------------------------

def _encoder_stack_kernel(emb_ref, mask_ref, embg_ref, embb_ref,
                          wqkv_ref, bqkv_ref, wo_ref, bo_ref,
                          ln1g_ref, ln1b_ref, w1_ref, b1_ref, w2_ref, b2_ref,
                          ln2g_ref, ln2b_ref, o_ref, x_scr,
                          *, num_heads, head_dim, eps):
    """All encoder layers for one batch element.  grid = (B, L); the residual
    stream is carried across the layer axis in the x_scr VMEM scratch."""
    H = num_heads * head_dim
    scale = 1.0 / float(head_dim) ** 0.5
    l = pl.program_id(1)

    @pl.when(l == 0)
    def _():
        # embedding LayerNorm fused into the first layer step
        x_scr[...] = _ln(emb_ref[...], embg_ref[...], embb_ref[...], eps)

    x = x_scr[...]                                    # (S, H) f32 residual stream
    mask_add = mask_ref[...]                          # (1, S) additive mask
    wqkv = wqkv_ref[...]                              # (H, 3H) bf16
    wo = wo_ref[...]                                  # (H, H)  bf16

    # fused Q|K|V projection — one MXU matmul, bf16 operands, f32 accumulate
    qkv = jnp.dot(x.astype(jnp.bfloat16), wqkv,
                  preferred_element_type=jnp.float32) + bqkv_ref[...]   # (S, 3H)

    attn_out = None
    for h in range(num_heads):                        # static unroll over heads
        lo = h * head_dim
        q = qkv[:, lo:lo + head_dim]                  # (S, dh) f32
        k = qkv[:, H + lo:H + lo + head_dim]
        v = qkv[:, 2 * H + lo:2 * H + lo + head_dim]
        s = jax.lax.dot_general(q, k, (((1,), (1,)), ((), ())),
                                preferred_element_type=jnp.float32) * scale
        s = s + mask_add                              # (S, S) + (1, S)
        s = s - jnp.max(s, axis=-1, keepdims=True)
        p = jnp.exp(s)
        p = p * pl.reciprocal(jnp.sum(p, axis=-1, keepdims=True), approx=True)
        ctx = jnp.dot(p.astype(jnp.bfloat16), v.astype(jnp.bfloat16),
                      preferred_element_type=jnp.float32)               # (S, dh)
        # accumulate the output projection per-head (avoids a concat)
        proj = jnp.dot(ctx.astype(jnp.bfloat16), wo[lo:lo + head_dim, :],
                       preferred_element_type=jnp.float32)              # (S, H)
        attn_out = proj if attn_out is None else attn_out + proj
    attn_out = attn_out + bo_ref[...]

    # residual + LayerNorm (f32)
    x1 = _ln(x + attn_out, ln1g_ref[...], ln1b_ref[...], eps)

    # fused FFN: w1 -> GELU -> w2
    h1 = jnp.dot(x1.astype(jnp.bfloat16), w1_ref[...],
                 preferred_element_type=jnp.float32) + b1_ref[...]
    h1 = _gelu_exact(h1)
    ff = jnp.dot(h1.astype(jnp.bfloat16), w2_ref[...],
                 preferred_element_type=jnp.float32) + b2_ref[...]

    x2 = _ln(x1 + ff, ln2g_ref[...], ln2b_ref[...], eps)
    x_scr[...] = x2

    @pl.when(l == pl.num_programs(1) - 1)
    def _():
        o_ref[...] = x2.astype(o_ref.dtype)


def encoder(params, emb, inputs_masks, cfg, eps=1e-5):
    """Full encoder (embedding LN + all layers) in one pallas_call."""
    B, S, H = emb.shape
    nh = cfg["num_attention_heads"]
    dh = H // nh
    I = cfg["intermediate_size"]
    enc = params["enc"]

    mask_add = ((1.0 - inputs_masks.astype(jnp.float32)) * -1e9)[:, None, :]  # (B,1,S)

    def layer_spec(shape):          # stacked (L, ...) weights indexed by layer axis
        nd = len(shape)
        return pl.BlockSpec((None,) + shape, lambda b, l, _nd=nd: (l,) + (0,) * _nd)

    def bcast_spec(shape):          # whole array, same block every step
        nd = len(shape)
        return pl.BlockSpec(shape, lambda b, l, _nd=nd: (0,) * _nd)

    kernel = functools.partial(_encoder_stack_kernel,
                               num_heads=nh, head_dim=dh, eps=eps)
    L = cfg["num_hidden_layers"]
    return pl.pallas_call(
        kernel,
        out_shape=jax.ShapeDtypeStruct((B, S, H), jnp.float32),
        grid=(B, L),
        in_specs=[
            pl.BlockSpec((None, S, H), lambda b, l: (b, 0, 0)),   # embeddings
            pl.BlockSpec((None, 1, S), lambda b, l: (b, 0, 0)),   # additive mask
            bcast_spec((1, H)), bcast_spec((1, H)),               # emb LN g,b
            layer_spec((H, 3 * H)), layer_spec((1, 3 * H)),       # wqkv, bqkv
            layer_spec((H, H)), layer_spec((1, H)),               # wo, bo
            layer_spec((1, H)), layer_spec((1, H)),               # ln1 g,b
            layer_spec((H, I)), layer_spec((1, I)),               # w1, b1
            layer_spec((I, H)), layer_spec((1, H)),               # w2, b2
            layer_spec((1, H)), layer_spec((1, H)),               # ln2 g,b
        ],
        out_specs=pl.BlockSpec((None, S, H), lambda b, l: (b, 0, 0)),
        scratch_shapes=[pltpu.VMEM((S, H), jnp.float32)],         # residual carry
        compiler_params=pltpu.CompilerParams(
            dimension_semantics=("parallel", "arbitrary")),       # megacore over B
    )(emb, mask_add, params["emb_ln_g"], params["emb_ln_b"],
      enc["wqkv"], enc["bqkv"], enc["wo"], enc["bo"],
      enc["ln1_g"], enc["ln1_b"], enc["w1"], enc["b1"], enc["w2"], enc["b2"],
      enc["ln2_g"], enc["ln2_b"])


# ----------------- fused pooling + both SliceMLP heads ----------------------

def _pool_heads_kernel(stmt_mask_ref, var_mask_ref, emb_ref,
                       bw1s_ref, bw1v_ref, bb1_ref, bw2_ref, bb2_ref, bw3_ref,
                       fw1s_ref, fw1v_ref, fb1_ref, fw2_ref, fb2_ref, fw3_ref,
                       b3_ref, o_ref, *, strategy):
    """Statement/variable pooling + both SliceMLP heads.

    fc1(concat(stmt, var)) == stmt @ w1[:H] + var @ w1[H:] + b1, so the concat
    from the reference is folded into two matmuls.  fc3 weights are pre-padded
    to 128 lanes (back -> col 0, forward -> col 1) for an unmasked store."""
    emb = emb_ref[...]                                 # (B, S, H) f32

    def mean_pool(mask):                               # (B, M, S) -> (B, M, H)
        s = jnp.einsum("bms,bsh->bmh", mask, emb,
                       preferred_element_type=jnp.float32)
        cnt = jnp.sum(mask, axis=-1, keepdims=True)
        return s / jnp.maximum(cnt, 1.0)               # guard empty rows (exact)

    def max_pool(mask):
        sel = jnp.where(mask[:, :, :, None] > 0, emb[:, None, :, :], -1e30)
        out = jnp.max(sel, axis=2)
        cnt = jnp.sum(mask, axis=-1, keepdims=True)
        return jnp.where(cnt > 0, out, 0.0)            # guard empty rows

    do_pool = mean_pool if strategy == "mean" else max_pool
    stmt = do_pool(stmt_mask_ref[...]).astype(jnp.bfloat16)   # (B, M, H)
    var = do_pool(var_mask_ref[...]).astype(jnp.bfloat16)     # (B, 1, H)

    def head(w1s, w1v, b1, w2, b2, w3pad):
        h = (jnp.einsum("bmh,hk->bmk", stmt, w1s[...],
                        preferred_element_type=jnp.float32)
             + jnp.einsum("bmh,hk->bmk", var, w1v[...],
                          preferred_element_type=jnp.float32)   # broadcast over m
             + b1[...])
        h = _gelu_exact(h).astype(jnp.bfloat16)        # dropout = identity
        h = jnp.einsum("bmh,hk->bmk", h, w2[...],
                       preferred_element_type=jnp.float32) + b2[...]
        h = _gelu_exact(h)                             # dropout = identity
        return jnp.einsum("bmh,hk->bmk", h, w3pad[...],
                          preferred_element_type=jnp.float32)

    y = (head(bw1s_ref, bw1v_ref, bb1_ref, bw2_ref, bb2_ref, bw3_ref)
         + head(fw1s_ref, fw1v_ref, fb1_ref, fw2_ref, fb2_ref, fw3_ref)
         + b3_ref[...])
    o_ref[...] = jax.nn.sigmoid(y).astype(o_ref.dtype)


def pool_and_heads(stmt_mask, var_mask, encoded, head_args, strategy):
    B, M, _ = stmt_mask.shape
    return pl.pallas_call(
        functools.partial(_pool_heads_kernel, strategy=strategy),
        out_shape=jax.ShapeDtypeStruct((B, M, _PRED_LANES), jnp.float32),
        in_specs=[_vmem_spec()] * (3 + len(head_args)),
        out_specs=_vmem_spec(),
    )(stmt_mask, var_mask, encoded, *head_args)


# ----------------------------- params --------------------------------------

def init_params(seed, cfg, max_tokens, seq):
    H, I, L = cfg["hidden_size"], cfg["intermediate_size"], cfg["num_hidden_layers"]
    base = jax.random.PRNGKey(seed)
    counter = [0]

    def nk():
        counter[0] += 1
        return jax.random.fold_in(base, counter[0])

    def dense(shape, scale=0.02):
        return (scale * jax.random.normal(nk(), shape)).astype(jnp.float32)

    params = {
        "word_emb": dense((cfg["vocab_size"], H)),
        "pos_emb": dense((seq, H)),
        "stmt_emb": dense((max_tokens, H)),            # self.statement_embeddings
        "emb_ln_g": jnp.ones((1, H), jnp.float32),
        "emb_ln_b": jnp.zeros((1, H), jnp.float32),
    }

    # stacked per-layer encoder weights (L, ...) — indexed by the layer grid axis
    wqkv = jnp.stack([jnp.concatenate([dense((H, H)), dense((H, H)), dense((H, H))],
                                      axis=1) for _ in range(L)])
    params["enc"] = {
        "wqkv": wqkv.astype(jnp.bfloat16),
        "bqkv": jnp.zeros((L, 1, 3 * H), jnp.float32),
        "wo": jnp.stack([dense((H, H)) for _ in range(L)]).astype(jnp.bfloat16),
        "bo": jnp.zeros((L, 1, H), jnp.float32),
        "ln1_g": jnp.ones((L, 1, H), jnp.float32),
        "ln1_b": jnp.zeros((L, 1, H), jnp.float32),
        "w1": jnp.stack([dense((H, I)) for _ in range(L)]).astype(jnp.bfloat16),
        "b1": jnp.zeros((L, 1, I), jnp.float32),
        "w2": jnp.stack([dense((I, H)) for _ in range(L)]).astype(jnp.bfloat16),
        "b2": jnp.zeros((L, 1, H), jnp.float32),
        "ln2_g": jnp.ones((L, 1, H), jnp.float32),
        "ln2_b": jnp.zeros((L, 1, H), jnp.float32),
    }

    def head_params(col):
        w1 = dense((2 * H, H))                         # fc1 over concat(stmt, var)
        w3 = dense((H, 1))                             # fc3
        return {
            "w1s": w1[:H].astype(jnp.bfloat16),
            "w1v": w1[H:].astype(jnp.bfloat16),
            "b1": jnp.zeros((1, H), jnp.float32),
            "w2": dense((H, H)).astype(jnp.bfloat16),
            "b2": jnp.zeros((1, H), jnp.float32),
            "w3pad": jnp.zeros((H, _PRED_LANES), jnp.float32).at[:, col].set(w3[:, 0]),
        }

    params["back_mlp"] = head_params(0)
    params["forward_mlp"] = head_params(1)
    # fc3 biases packed lane-dense: col 0 = back head, col 1 = forward head
    params["b3pad"] = (jnp.zeros((1, _PRED_LANES), jnp.float32)
                       .at[0, 0].set(dense((1,))[0])
                       .at[0, 1].set(dense((1,))[0]))
    return params


# ----------------------------- model (glue) ---------------------------------

def auto_slicing_forward(params, cfg, inputs_ids, inputs_masks, statements_ids,
                         variables_ids, variables_line_numbers,
                         pooling_strategy="mean", use_statement_ids=True,
                         max_tokens=16):
    B, S = inputs_ids.shape
    M = max_tokens

    # embeddings (word + statement ids + position); plain-JAX gathers are glue
    emb = params["word_emb"][inputs_ids]
    if use_statement_ids:
        emb = emb + params["stmt_emb"][statements_ids]
    emb = emb + params["pos_emb"][None, :S, :]

    # one fused pallas_call for the whole encoder stack
    encoded = encoder(params, emb.astype(jnp.float32), inputs_masks, cfg)  # (B,S,H)

    # --- host-side vectorized mask construction (data-dependent gathers of the
    #     reference forward) -------------------------------------------------
    sid = np.asarray(statements_ids)
    vid = np.asarray(variables_ids)
    vln = np.asarray(variables_line_numbers)

    # variable-token mask (duplicates counted, matching torch.mean over gathered rows)
    var_mask = np.zeros((B, 1, S), np.float32)
    bb, vv = np.nonzero(vid != -1)
    np.add.at(var_mask, (bb, np.zeros_like(bb), vid[bb, vv].astype(np.int64)), 1.0)

    # statement membership mask, padded to max_tokens statement slots
    stmt_mask = np.zeros((B, M, S), np.float32)
    valid = sid != (M - 1)                             # M-1 is the pad sentinel
    bb2, pp = np.nonzero(valid)
    stmt_mask[bb2, sid[bb2, pp], pp] = 1.0
    n_stmt = np.where(valid.any(axis=1),
                      np.where(valid, sid, -1).max(axis=1) + 1, 0)

    # --- fused pooling + both SliceMLP heads (one pallas_call) --------------
    bm, fm = params["back_mlp"], params["forward_mlp"]
    head_args = (bm["w1s"], bm["w1v"], bm["b1"], bm["w2"], bm["b2"], bm["w3pad"],
                 fm["w1s"], fm["w1v"], fm["b1"], fm["w2"], fm["b2"], fm["w3pad"],
                 params["b3pad"])
    preds_pad = pool_and_heads(jnp.asarray(stmt_mask), jnp.asarray(var_mask),
                               encoded, head_args, pooling_strategy)  # (B,M,128)
    preds = np.asarray(preds_pad)[:, :, :2]            # col0=back, col1=forward

    # --- per-example back/forward split (pure host-side slicing) ------------
    batch_preds = {"back": [], "forward": []}
    for b in range(B):
        vl = int(vln[b])
        ns = int(n_stmt[b])
        batch_preds["back"].append(jnp.asarray(np.squeeze(preds[b, :vl, 0])))
        batch_preds["forward"].append(jnp.asarray(np.squeeze(preds[b, vl + 1:ns, 1])))

    # TODO(synk): BCELoss / (batch_loss, batch_preds, batch_true) path omitted
    # (slices_labels=None branch of the reference forward).
    return batch_preds


# ----------------------------- main ----------------------------------------

if __name__ == "__main__":
    cfg = {
        "hidden_size": 32,
        "num_hidden_layers": 2,
        "num_attention_heads": 4,
        "intermediate_size": 64,
        "vocab_size": 64,
    }
    MAX_TOKENS = 16
    B, S = 2, 16

    params = init_params(0, cfg, MAX_TOKENS, S)

    key = jax.random.PRNGKey(0)
    inputs_ids = jax.random.randint(key, (B, S), 0, cfg["vocab_size"], dtype=jnp.int32)
    inputs_masks = jnp.array([[1] * 14 + [0] * 2,
                              [1] * 16], dtype=jnp.float32)
    statements_ids = jnp.array(
        [[0, 0, 0, 1, 1, 1, 2, 2, 2, 3, 3, 4, 4, 4, 15, 15],
         [0, 0, 0, 0, 1, 1, 1, 1, 2, 2, 2, 2, 3, 3, 3, 3]], dtype=jnp.int32)
    variables_ids = jnp.array([[2, 3, -1],
                               [5, 6, 7]], dtype=jnp.int32)
    variables_line_numbers = jnp.array([2, 1], dtype=jnp.int32)

    preds = auto_slicing_forward(params, cfg, inputs_ids, inputs_masks,
                                 statements_ids, variables_ids,
                                 variables_line_numbers,
                                 pooling_strategy="mean",
                                 use_statement_ids=True,
                                 max_tokens=MAX_TOKENS)
    jax.block_until_ready(preds)
    print("KERNEL_OK")
</pallas_src>

<mosaic_0001>
module attributes {stable_mosaic.version = 11 : i64} {
  func.func @_encoder_stack_kernel(%arg0: i32, %arg1: i32, %arg2: memref<1x16x32xf32, #tpu.memory_space<vmem>>, %arg3: memref<1x1x16xf32, #tpu.memory_space<vmem>>, %arg4: memref<1x32xf32, #tpu.memory_space<vmem>>, %arg5: memref<1x32xf32, #tpu.memory_space<vmem>>, %arg6: memref<1x32x96xbf16, #tpu.memory_space<vmem>>, %arg7: memref<1x1x96xf32, #tpu.memory_space<vmem>>, %arg8: memref<1x32x32xbf16, #tpu.memory_space<vmem>>, %arg9: memref<1x1x32xf32, #tpu.memory_space<vmem>>, %arg10: memref<1x1x32xf32, #tpu.memory_space<vmem>>, %arg11: memref<1x1x32xf32, #tpu.memory_space<vmem>>, %arg12: memref<1x32x64xbf16, #tpu.memory_space<vmem>>, %arg13: memref<1x1x64xf32, #tpu.memory_space<vmem>>, %arg14: memref<1x64x32xbf16, #tpu.memory_space<vmem>>, %arg15: memref<1x1x32xf32, #tpu.memory_space<vmem>>, %arg16: memref<1x1x32xf32, #tpu.memory_space<vmem>>, %arg17: memref<1x1x32xf32, #tpu.memory_space<vmem>>, %arg18: memref<1x16x32xf32, #tpu.memory_space<vmem>>, %arg19: memref<16x32xf32, #tpu.memory_space<vmem>>) attributes {dimension_semantics = [#tpu.dimension_semantics<parallel>, #tpu.dimension_semantics<arbitrary>], iteration_bounds = array<i64: 2, 2>, scalar_prefetch = 0 : i64, scratch_operands = 1 : i64, tpu.core_type = #tpu.core_type<tc>, window_params = [{transform_indices = @transform_0, window_bounds = array<i64: 1, 16, 32>}, {transform_indices = @transform_1, window_bounds = array<i64: 1, 1, 16>}, {pipeline_mode = #tpu.pipeline_mode<synchronous>, transform_indices = @transform_2, window_bounds = array<i64: 1, 32>}, {pipeline_mode = #tpu.pipeline_mode<synchronous>, transform_indices = @transform_3, window_bounds = array<i64: 1, 32>}, {transform_indices = @transform_4, window_bounds = array<i64: 1, 32, 96>}, {transform_indices = @transform_5, window_bounds = array<i64: 1, 1, 96>}, {transform_indices = @transform_6, window_bounds = array<i64: 1, 32, 32>}, {transform_indices = @transform_7, window_bounds = array<i64: 1, 1, 32>}, {transform_indices = @transform_8, window_bounds = array<i64: 1, 1, 32>}, {transform_indices = @transform_9, window_bounds = array<i64: 1, 1, 32>}, {transform_indices = @transform_10, window_bounds = array<i64: 1, 32, 64>}, {transform_indices = @transform_11, window_bounds = array<i64: 1, 1, 64>}, {transform_indices = @transform_12, window_bounds = array<i64: 1, 64, 32>}, {transform_indices = @transform_13, window_bounds = array<i64: 1, 1, 32>}, {transform_indices = @transform_14, window_bounds = array<i64: 1, 1, 32>}, {transform_indices = @transform_15, window_bounds = array<i64: 1, 1, 32>}, {transform_indices = @transform_16, window_bounds = array<i64: 1, 16, 32>}]} {
    %c0_i32 = arith.constant 0 : i32
    %0 = arith.cmpi eq, %arg1, %c0_i32 : i32
    %1 = arith.extui %0 : i1 to i32
    %c0_i32_0 = arith.constant 0 : i32
    %2 = arith.cmpi ne, %1, %c0_i32_0 : i32
    scf.if %2 {
      %c0_83 = arith.constant 0 : index
      %c0_84 = arith.constant 0 : index
      %c0_85 = arith.constant 0 : index
      %201 = vector.load %arg2[%c0_83, %c0_84, %c0_85] : memref<1x16x32xf32, #tpu.memory_space<vmem>>, vector<1x16x32xf32>
      %202 = vector.shape_cast %201 : vector<1x16x32xf32> to vector<16x32xf32>
      %c0_86 = arith.constant 0 : index
      %c0_87 = arith.constant 0 : index
      %203 = vector.load %arg4[%c0_86, %c0_87] : memref<1x32xf32, #tpu.memory_space<vmem>>, vector<1x32xf32>
      %c0_88 = arith.constant 0 : index
      %c0_89 = arith.constant 0 : index
      %204 = vector.load %arg5[%c0_88, %c0_89] : memref<1x32xf32, #tpu.memory_space<vmem>>, vector<1x32xf32>
      %cst_90 = arith.constant dense<0.000000e+00> : vector<16xf32>
      %205 = vector.multi_reduction <add>, %202, %cst_90 [1] : vector<16x32xf32> to vector<16xf32>
      %206 = vector.shape_cast %205 : vector<16xf32> to vector<16x1xf32>
      %cst_91 = arith.constant 3.200000e+01 : f32
      %207 = vector.broadcast %cst_91 : f32 to vector<16x1xf32>
      %208 = arith.divf %206, %207 : vector<16x1xf32>
      %209 = vector.broadcast %208 : vector<16x1xf32> to vector<16x32xf32>
      %210 = arith.subf %202, %209 : vector<16x32xf32>
      %211 = arith.mulf %210, %210 : vector<16x32xf32>
      %cst_92 = arith.constant dense<0.000000e+00> : vector<16xf32>
      %212 = vector.multi_reduction <add>, %211, %cst_92 [1] : vector<16x32xf32> to vector<16xf32>
      %213 = vector.shape_cast %212 : vector<16xf32> to vector<16x1xf32>
      %cst_93 = arith.constant 3.200000e+01 : f32
      %214 = vector.broadcast %cst_93 : f32 to vector<16x1xf32>
      %215 = arith.divf %213, %214 : vector<16x1xf32>
      %216 = vector.broadcast %208 : vector<16x1xf32> to vector<16x32xf32>
      %217 = arith.subf %202, %216 : vector<16x32xf32>
      %cst_94 = arith.constant 9.99999974E-6 : f32
      %218 = vector.broadcast %cst_94 : f32 to vector<16x1xf32>
      %219 = arith.addf %215, %218 : vector<16x1xf32>
      %220 = math.rsqrt %219 : vector<16x1xf32>
      %221 = vector.broadcast %220 : vector<16x1xf32> to vector<16x32xf32>
      %222 = arith.mulf %217, %221 : vector<16x32xf32>
      %223 = vector.broadcast %203 : vector<1x32xf32> to vector<16x32xf32>
      %224 = arith.mulf %222, %223 : vector<16x32xf32>
      %225 = vector.broadcast %204 : vector<1x32xf32> to vector<16x32xf32>
      %226 = arith.addf %224, %225 : vector<16x32xf32>
      %c0_95 = arith.constant 0 : index
      %c0_96 = arith.constant 0 : index
      %227 = vector.load %arg19[%c0_95, %c0_96] : memref<16x32xf32, #tpu.memory_space<vmem>>, vector<16x32xf32>
      tpu.vector_store %arg19[%c0_95, %c0_96], %226 {strides = array<i32>} : memref<16x32xf32, #tpu.memory_space<vmem>>, vector<16x32xf32>,
    } else {
    }
    %c0 = arith.constant 0 : index
    %c0_1 = arith.constant 0 : index
    %3 = vector.load %arg19[%c0, %c0_1] : memref<16x32xf32, #tpu.memory_space<vmem>>, vector<16x32xf32>
    %c0_2 = arith.constant 0 : index
    %c0_3 = arith.constant 0 : index
    %c0_4 = arith.constant 0 : index
    %4 = vector.load %arg3[%c0_2, %c0_3, %c0_4] : memref<1x1x16xf32, #tpu.memory_space<vmem>>, vector<1x1x16xf32>
    %5 = vector.shape_cast %4 : vector<1x1x16xf32> to vector<1x16xf32>
    %c0_5 = arith.constant 0 : index
    %c0_6 = arith.constant 0 : index
    %c0_7 = arith.constant 0 : index
    %6 = vector.load %arg6[%c0_5, %c0_6, %c0_7] : memref<1x32x96xbf16, #tpu.memory_space<vmem>>, vector<1x32x96xbf16>
    %7 = vector.shape_cast %6 : vector<1x32x96xbf16> to vector<32x96xbf16>
    %c0_8 = arith.constant 0 : index
    %c0_9 = arith.constant 0 : index
    %c0_10 = arith.constant 0 : index
    %8 = vector.load %arg8[%c0_8, %c0_9, %c0_10] : memref<1x32x32xbf16, #tpu.memory_space<vmem>>, vector<1x32x32xbf16>
    %9 = vector.shape_cast %8 : vector<1x32x32xbf16> to vector<32x32xbf16>
    %10 = arith.truncf %3 : vector<16x32xf32> to vector<16x32xbf16>
    %cst = arith.constant dense<0.000000e+00> : vector<16x96xf32>
    %11 = tpu.matmul %10, %7, %cst {dimension_numbers = #tpu.dot_dimension_numbers<[1], [0], [0], [1], [0, 0, 1, 1], [], []>} : vector<16x32xbf16>, vector<32x96xbf16>, vector<16x96xf32> -> vector<16x96xf32>
    %c0_11 = arith.constant 0 : index
    %c0_12 = arith.constant 0 : index
    %c0_13 = arith.constant 0 : index
    %12 = vector.load %arg7[%c0_11, %c0_12, %c0_13] : memref<1x1x96xf32, #tpu.memory_space<vmem>>, vector<1x1x96xf32>
    %13 = vector.shape_cast %12 : vector<1x1x96xf32> to vector<1x96xf32>
    %14 = vector.broadcast %13 : vector<1x96xf32> to vector<16x96xf32>
    %15 = arith.addf %11, %14 : vector<16x96xf32>
    %16 = vector.extract_strided_slice %15 {offsets = [0, 0], sizes = [16, 8], strides = [1, 1]} : vector<16x96xf32> to vector<16x8xf32>
    %17 = vector.extract_strided_slice %15 {offsets = [0, 32], sizes = [16, 8], strides = [1, 1]} : vector<16x96xf32> to vector<16x8xf32>
    %18 = vector.extract_strided_slice %15 {offsets = [0, 64], sizes = [16, 8], strides = [1, 1]} : vector<16x96xf32> to vector<16x8xf32>
    %cst_14 = arith.constant dense<0.000000e+00> : vector<16x16xf32>
    %19 = tpu.matmul %16, %17, %cst_14 {dimension_numbers = #tpu.dot_dimension_numbers<[1], [1], [0], [0], [0, 0, 1, 0], [], []>} : vector<16x8xf32>, vector<16x8xf32>, vector<16x16xf32> -> vector<16x16xf32>
    %cst_15 = arith.constant 0.353553385 : f32
    %20 = vector.broadcast %cst_15 : f32 to vector<16x16xf32>
    %21 = arith.mulf %19, %20 : vector<16x16xf32>
    %22 = vector.broadcast %5 : vector<1x16xf32> to vector<16x16xf32>
    %23 = arith.addf %21, %22 : vector<16x16xf32>
    %cst_16 = arith.constant dense<0xFF800000> : vector<16xf32>
    %24 = vector.multi_reduction <maximumf>, %23, %cst_16 [1] : vector<16x16xf32> to vector<16xf32>
    %25 = vector.shape_cast %24 : vector<16xf32> to vector<16x1xf32>
    %26 = vector.broadcast %25 : vector<16x1xf32> to vector<16x16xf32>
    %27 = arith.subf %23, %26 : vector<16x16xf32>
    %28 = math.exp %27 : vector<16x16xf32>
    %cst_17 = arith.constant dense<0.000000e+00> : vector<16xf32>
    %29 = vector.multi_reduction <add>, %28, %cst_17 [1] : vector<16x16xf32> to vector<16xf32>
    %30 = vector.shape_cast %29 : vector<16xf32> to vector<16x1xf32>
    %31 = tpu.reciprocal %30 {approx = true} : vector<16x1xf32> -> vector<16x1xf32>
    %32 = vector.broadcast %31 : vector<16x1xf32> to vector<16x16xf32>
    %33 = arith.mulf %28, %32 : vector<16x16xf32>
    %34 = arith.truncf %33 : vector<16x16xf32> to vector<16x16xbf16>
    %35 = arith.truncf %18 : vector<16x8xf32> to vector<16x8xbf16>
    %cst_18 = arith.constant dense<0.000000e+00> : vector<16x8xf32>
    %36 = tpu.matmul %34, %35, %cst_18 {dimension_numbers = #tpu.dot_dimension_numbers<[1], [0], [0], [1], [0, 0, 1, 1], [], []>} : vector<16x16xbf16>, vector<16x8xbf16>, vector<16x8xf32> -> vector<16x8xf32>
    %37 = arith.truncf %36 : vector<16x8xf32> to vector<16x8xbf16>
    %38 = vector.extract_strided_slice %9 {offsets = [0, 0], sizes = [8, 32], strides = [1, 1]} : vector<32x32xbf16> to vector<8x32xbf16>
    %cst_19 = arith.constant dense<0.000000e+00> : vector<16x32xf32>
    %39 = tpu.matmul %37, %38, %cst_19 {dimension_numbers = #tpu.dot_dimension_numbers<[1], [0], [0], [1], [0, 0, 1, 1], [], []>} : vector<16x8xbf16>, vector<8x32xbf16>, vector<16x32xf32> -> vector<16x32xf32>
    %40 = vector.extract_strided_slice %15 {offsets = [0, 8], sizes = [16, 8], strides = [1, 1]} : vector<16x96xf32> to vector<16x8xf32>
    %41 = vector.extract_strided_slice %15 {offsets = [0, 40], sizes = [16, 8], strides = [1, 1]} : vector<16x96xf32> to vector<16x8xf32>
    %42 = vector.extract_strided_slice %15 {offsets = [0, 72], sizes = [16, 8], strides = [1, 1]} : vector<16x96xf32> to vector<16x8xf32>
    %cst_20 = arith.constant dense<0.000000e+00> : vector<16x16xf32>
    %43 = tpu.matmul %40, %41, %cst_20 {dimension_numbers = #tpu.dot_dimension_numbers<[1], [1], [0], [0], [0, 0, 1, 0], [], []>} : vector<16x8xf32>, vector<16x8xf32>, vector<16x16xf32> -> vector<16x16xf32>
    %cst_21 = arith.constant 0.353553385 : f32
    %44 = vector.broadcast %cst_21 : f32 to vector<16x16xf32>
    %45 = arith.mulf %43, %44 : vector<16x16xf32>
    %46 = vector.broadcast %5 : vector<1x16xf32> to vector<16x16xf32>
    %47 = arith.addf %45, %46 : vector<16x16xf32>
    %cst_22 = arith.constant dense<0xFF800000> : vector<16xf32>
    %48 = vector.multi_reduction <maximumf>, %47, %cst_22 [1] : vector<16x16xf32> to vector<16xf32>
    %49 = vector.shape_cast %48 : vector<16xf32> to vector<16x1xf32>
    %50 = vector.broadcast %49 : vector<16x1xf32> to vector<16x16xf32>
    %51 = arith.subf %47, %50 : vector<16x16xf32>
    %52 = math.exp %51 : vector<16x16xf32>
    %cst_23 = arith.constant dense<0.000000e+00> : vector<16xf32>
    %53 = vector.multi_reduction <add>, %52, %cst_23 [1] : vector<16x16xf32> to vector<16xf32>
    %54 = vector.shape_cast %53 : vector<16xf32> to vector<16x1xf32>
    %55 = tpu.reciprocal %54 {approx = true} : vector<16x1xf32> -> vector<16x1xf32>
    %56 = vector.broadcast %55 : vector<16x1xf32> to vector<16x16xf32>
    %57 = arith.mulf %52, %56 : vector<16x16xf32>
    %58 = arith.truncf %57 : vector<16x16xf32> to vector<16x16xbf16>
    %59 = arith.truncf %42 : vector<16x8xf32> to vector<16x8xbf16>
    %cst_24 = arith.constant dense<0.000000e+00> : vector<16x8xf32>
    %60 = tpu.matmul %58, %59, %cst_24 {dimension_numbers = #tpu.dot_dimension_numbers<[1], [0], [0], [1], [0, 0, 1, 1], [], []>} : vector<16x16xbf16>, vector<16x8xbf16>, vector<16x8xf32> -> vector<16x8xf32>
    %61 = arith.truncf %60 : vector<16x8xf32> to vector<16x8xbf16>
    %62 = vector.extract_strided_slice %9 {offsets = [8, 0], sizes = [8, 32], strides = [1, 1]} : vector<32x32xbf16> to vector<8x32xbf16>
    %cst_25 = arith.constant dense<0.000000e+00> : vector<16x32xf32>
    %63 = tpu.matmul %61, %62, %cst_25 {dimension_numbers = #tpu.dot_dimension_numbers<[1], [0], [0], [1], [0, 0, 1, 1], [], []>} : vector<16x8xbf16>, vector<8x32xbf16>, vector<16x32xf32> -> vector<16x32xf32>
    %64 = arith.addf %39, %63 : vector<16x32xf32>
    %65 = vector.extract_strided_slice %15 {offsets = [0, 16], sizes = [16, 8], strides = [1, 1]} : vector<16x96xf32> to vector<16x8xf32>
    %66 = vector.extract_strided_slice %15 {offsets = [0, 48], sizes = [16, 8], strides = [1, 1]} : vector<16x96xf32> to vector<16x8xf32>
    %67 = vector.extract_strided_slice %15 {offsets = [0, 80], sizes = [16, 8], strides = [1, 1]} : vector<16x96xf32> to vector<16x8xf32>
    %cst_26 = arith.constant dense<0.000000e+00> : vector<16x16xf32>
    %68 = tpu.matmul %65, %66, %cst_26 {dimension_numbers = #tpu.dot_dimension_numbers<[1], [1], [0], [0], [0, 0, 1, 0], [], []>} : vector<16x8xf32>, vector<16x8xf32>, vector<16x16xf32> -> vector<16x16xf32>
    %cst_27 = arith.constant 0.353553385 : f32
    %69 = vector.broadcast %cst_27 : f32 to vector<16x16xf32>
    %70 = arith.mulf %68, %69 : vector<16x16xf32>
    %71 = vector.broadcast %5 : vector<1x16xf32> to vector<16x16xf32>
    %72 = arith.addf %70, %71 : vector<16x16xf32>
    %cst_28 = arith.constant dense<0xFF800000> : vector<16xf32>
    %73 = vector.multi_reduction <maximumf>, %72, %cst_28 [1] : vector<16x16xf32> to vector<16xf32>
    %74 = vector.shape_cast %73 : vector<16xf32> to vector<16x1xf32>
    %75 = vector.broadcast %74 : vector<16x1xf32> to vector<16x16xf32>
    %76 = arith.subf %72, %75 : vector<16x16xf32>
    %77 = math.exp %76 : vector<16x16xf32>
    %cst_29 = arith.constant dense<0.000000e+00> : vector<16xf32>
    %78 = vector.multi_reduction <add>, %77, %cst_29 [1] : vector<16x16xf32> to vector<16xf32>
    %79 = vector.shape_cast %78 : vector<16xf32> to vector<16x1xf32>
    %80 = tpu.reciprocal %79 {approx = true} : vector<16x1xf32> -> vector<16x1xf32>
    %81 = vector.broadcast %80 : vector<16x1xf32> to vector<16x16xf32>
    %82 = arith.mulf %77, %81 : vector<16x16xf32>
    %83 = arith.truncf %82 : vector<16x16xf32> to vector<16x16xbf16>
    %84 = arith.truncf %67 : vector<16x8xf32> to vector<16x8xbf16>
    %cst_30 = arith.constant dense<0.000000e+00> : vector<16x8xf32>
    %85 = tpu.matmul %83, %84, %cst_30 {dimension_numbers = #tpu.dot_dimension_numbers<[1], [0], [0], [1], [0, 0, 1, 1], [], []>} : vector<16x16xbf16>, vector<16x8xbf16>, vector<16x8xf32> -> vector<16x8xf32>
    %86 = arith.truncf %85 : vector<16x8xf32> to vector<16x8xbf16>
    %87 = vector.extract_strided_slice %9 {offsets = [16, 0], sizes = [8, 32], strides = [1, 1]} : vector<32x32xbf16> to vector<8x32xbf16>
    %cst_31 = arith.constant dense<0.000000e+00> : vector<16x32xf32>
    %88 = tpu.matmul %86, %87, %cst_31 {dimension_numbers = #tpu.dot_dimension_numbers<[1], [0], [0], [1], [0, 0, 1, 1], [], []>} : vector<16x8xbf16>, vector<8x32xbf16>, vector<16x32xf32> -> vector<16x32xf32>
    %89 = arith.addf %64, %88 : vector<16x32xf32>
    %90 = vector.extract_strided_slice %15 {offsets = [0, 24], sizes = [16, 8], strides = [1, 1]} : vector<16x96xf32> to vector<16x8xf32>
    %91 = vector.extract_strided_slice %15 {offsets = [0, 56], sizes = [16, 8], strides = [1, 1]} : vector<16x96xf32> to vector<16x8xf32>
    %92 = vector.extract_strided_slice %15 {offsets = [0, 88], sizes = [16, 8], strides = [1, 1]} : vector<16x96xf32> to vector<16x8xf32>
    %cst_32 = arith.constant dense<0.000000e+00> : vector<16x16xf32>
    %93 = tpu.matmul %90, %91, %cst_32 {dimension_numbers = #tpu.dot_dimension_numbers<[1], [1], [0], [0], [0, 0, 1, 0], [], []>} : vector<16x8xf32>, vector<16x8xf32>, vector<16x16xf32> -> vector<16x16xf32>
    %cst_33 = arith.constant 0.353553385 : f32
    %94 = vector.broadcast %cst_33 : f32 to vector<16x16xf32>
    %95 = arith.mulf %93, %94 : vector<16x16xf32>
    %96 = vector.broadcast %5 : vector<1x16xf32> to vector<16x16xf32>
    %97 = arith.addf %95, %96 : vector<16x16xf32>
    %cst_34 = arith.constant dense<0xFF800000> : vector<16xf32>
    %98 = vector.multi_reduction <maximumf>, %97, %cst_34 [1] : vector<16x16xf32> to vector<16xf32>
    %99 = vector.shape_cast %98 : vector<16xf32> to vector<16x1xf32>
    %100 = vector.broadcast %99 : vector<16x1xf32> to vector<16x16xf32>
    %101 = arith.subf %97, %100 : vector<16x16xf32>
    %102 = math.exp %101 : vector<16x16xf32>
    %cst_35 = arith.constant dense<0.000000e+00> : vector<16xf32>
    %103 = vector.multi_reduction <add>, %102, %cst_35 [1] : vector<16x16xf32> to vector<16xf32>
    %104 = vector.shape_cast %103 : vector<16xf32> to vector<16x1xf32>
    %105 = tpu.reciprocal %104 {approx = true} : vector<16x1xf32> -> vector<16x1xf32>
    %106 = vector.broadcast %105 : vector<16x1xf32> to vector<16x16xf32>
    %107 = arith.mulf %102, %106 : vector<16x16xf32>
    %108 = arith.truncf %107 : vector<16x16xf32> to vector<16x16xbf16>
    %109 = arith.truncf %92 : vector<16x8xf32> to vector<16x8xbf16>
    %cst_36 = arith.constant dense<0.000000e+00> : vector<16x8xf32>
    %110 = tpu.matmul %108, %109, %cst_36 {dimension_numbers = #tpu.dot_dimension_numbers<[1], [0], [0], [1], [0, 0, 1, 1], [], []>} : vector<16x16xbf16>, vector<16x8xbf16>, vector<16x8xf32> -> vector<16x8xf32>
    %111 = arith.truncf %110 : vector<16x8xf32> to vector<16x8xbf16>
    %112 = vector.extract_strided_slice %9 {offsets = [24, 0], sizes = [8, 32], strides = [1, 1]} : vector<32x32xbf16> to vector<8x32xbf16>
    %cst_37 = arith.constant dense<0.000000e+00> : vector<16x32xf32>
    %113 = tpu.matmul %111, %112, %cst_37 {dimension_numbers = #tpu.dot_dimension_numbers<[1], [0], [0], [1], [0, 0, 1, 1], [], []>} : vector<16x8xbf16>, vector<8x32xbf16>, vector<16x32xf32> -> vector<16x32xf32>
    %114 = arith.addf %89, %113 : vector<16x32xf32>
    %c0_38 = arith.constant 0 : index
    %c0_39 = arith.constant 0 : index
    %c0_40 = arith.constant 0 : index
    %115 = vector.load %arg9[%c0_38, %c0_39, %c0_40] : memref<1x1x32xf32, #tpu.memory_space<vmem>>, vector<1x1x32xf32>
    %116 = vector.shape_cast %115 : vector<1x1x32xf32> to vector<1x32xf32>
    %117 = vector.broadcast %116 : vector<1x32xf32> to vector<16x32xf32>
    %118 = arith.addf %114, %117 : vector<16x32xf32>
    %119 = arith.addf %3, %118 : vector<16x32xf32>
    %c0_41 = arith.constant 0 : index
    %c0_42 = arith.constant 0 : index
    %c0_43 = arith.constant 0 : index
    %120 = vector.load %arg10[%c0_41, %c0_42, %c0_43] : memref<1x1x32xf32, #tpu.memory_space<vmem>>, vector<1x1x32xf32>
    %121 = vector.shape_cast %120 : vector<1x1x32xf32> to vector<1x32xf32>
    %c0_44 = arith.constant 0 : index
    %c0_45 = arith.constant 0 : index
    %c0_46 = arith.constant 0 : index
    %122 = vector.load %arg11[%c0_44, %c0_45, %c0_46] : memref<1x1x32xf32, #tpu.memory_space<vmem>>, vector<1x1x32xf32>
    %123 = vector.shape_cast %122 : vector<1x1x32xf32> to vector<1x32xf32>
    %cst_47 = arith.constant dense<0.000000e+00> : vector<16xf32>
    %124 = vector.multi_reduction <add>, %119, %cst_47 [1] : vector<16x32xf32> to vector<16xf32>
    %125 = vector.shape_cast %124 : vector<16xf32> to vector<16x1xf32>
    %cst_48 = arith.constant 3.200000e+01 : f32
    %126 = vector.broadcast %cst_48 : f32 to vector<16x1xf32>
    %127 = arith.divf %125, %126 : vector<16x1xf32>
    %128 = vector.broadcast %127 : vector<16x1xf32> to vector<16x32xf32>
    %129 = arith.subf %119, %128 : vector<16x32xf32>
    %130 = arith.mulf %129, %129 : vector<16x32xf32>
    %cst_49 = arith.constant dense<0.000000e+00> : vector<16xf32>
    %131 = vector.multi_reduction <add>, %130, %cst_49 [1] : vector<16x32xf32> to vector<16xf32>
    %132 = vector.shape_cast %131 : vector<16xf32> to vector<16x1xf32>
    %cst_50 = arith.constant 3.200000e+01 : f32
    %133 = vector.broadcast %cst_50 : f32 to vector<16x1xf32>
    %134 = arith.divf %132, %133 : vector<16x1xf32>
    %135 = vector.broadcast %127 : vector<16x1xf32> to vector<16x32xf32>
    %136 = arith.subf %119, %135 : vector<16x32xf32>
    %cst_51 = arith.constant 9.99999974E-6 : f32
    %137 = vector.broadcast %cst_51 : f32 to vector<16x1xf32>
    %138 = arith.addf %134, %137 : vector<16x1xf32>
    %139 = math.rsqrt %138 : vector<16x1xf32>
    %140 = vector.broadcast %139 : vector<16x1xf32> to vector<16x32xf32>
    %141 = arith.mulf %136, %140 : vector<16x32xf32>
    %142 = vector.broadcast %121 : vector<1x32xf32> to vector<16x32xf32>
    %143 = arith.mulf %141, %142 : vector<16x32xf32>
    %144 = vector.broadcast %123 : vector<1x32xf32> to vector<16x32xf32>
    %145 = arith.addf %143, %144 : vector<16x32xf32>
    %146 = arith.truncf %145 : vector<16x32xf32> to vector<16x32xbf16>
    %c0_52 = arith.constant 0 : index
    %c0_53 = arith.constant 0 : index
    %c0_54 = arith.constant 0 : index
    %147 = vector.load %arg12[%c0_52, %c0_53, %c0_54] : memref<1x32x64xbf16, #tpu.memory_space<vmem>>, vector<1x32x64xbf16>
    %148 = vector.shape_cast %147 : vector<1x32x64xbf16> to vector<32x64xbf16>
    %cst_55 = arith.constant dense<0.000000e+00> : vector<16x64xf32>
    %149 = tpu.matmul %146, %148, %cst_55 {dimension_numbers = #tpu.dot_dimension_numbers<[1], [0], [0], [1], [0, 0, 1, 1], [], []>} : vector<16x32xbf16>, vector<32x64xbf16>, vector<16x64xf32> -> vector<16x64xf32>
    %c0_56 = arith.constant 0 : index
    %c0_57 = arith.constant 0 : index
    %c0_58 = arith.constant 0 : index
    %150 = vector.load %arg13[%c0_56, %c0_57, %c0_58] : memref<1x1x64xf32, #tpu.memory_space<vmem>>, vector<1x1x64xf32>
    %151 = vector.shape_cast %150 : vector<1x1x64xf32> to vector<1x64xf32>
    %152 = vector.broadcast %151 : vector<1x64xf32> to vector<16x64xf32>
    %153 = arith.addf %149, %152 : vector<16x64xf32>
    %cst_59 = arith.constant 5.000000e-01 : f32
    %154 = vector.broadcast %cst_59 : f32 to vector<16x64xf32>
    %155 = arith.mulf %154, %153 : vector<16x64xf32>
    %cst_60 = arith.constant 0.707106769 : f32
    %156 = vector.broadcast %cst_60 : f32 to vector<16x64xf32>
    %157 = arith.mulf %153, %156 : vector<16x64xf32>
    %158 = math.erf %157 : vector<16x64xf32>
    %cst_61 = arith.constant 1.000000e+00 : f32
    %159 = vector.broadcast %cst_61 : f32 to vector<16x64xf32>
    %160 = arith.addf %159, %158 : vector<16x64xf32>
    %161 = arith.mulf %155, %160 : vector<16x64xf32>
    %162 = arith.truncf %161 : vector<16x64xf32> to vector<16x64xbf16>
    %c0_62 = arith.constant 0 : index
    %c0_63 = arith.constant 0 : index
    %c0_64 = arith.constant 0 : index
    %163 = vector.load %arg14[%c0_62, %c0_63, %c0_64] : memref<1x64x32xbf16, #tpu.memory_space<vmem>>, vector<1x64x32xbf16>
    %164 = vector.shape_cast %163 : vector<1x64x32xbf16> to vector<64x32xbf16>
    %cst_65 = arith.constant dense<0.000000e+00> : vector<16x32xf32>
    %165 = tpu.matmul %162, %164, %cst_65 {dimension_numbers = #tpu.dot_dimension_numbers<[1], [0], [0], [1], [0, 0, 1, 1], [], []>} : vector<16x64xbf16>, vector<64x32xbf16>, vector<16x32xf32> -> vector<16x32xf32>
    %c0_66 = arith.constant 0 : index
    %c0_67 = arith.constant 0 : index
    %c0_68 = arith.constant 0 : index
    %166 = vector.load %arg15[%c0_66, %c0_67, %c0_68] : memref<1x1x32xf32, #tpu.memory_space<vmem>>, vector<1x1x32xf32>
    %167 = vector.shape_cast %166 : vector<1x1x32xf32> to vector<1x32xf32>
    %168 = vector.broadcast %167 : vector<1x32xf32> to vector<16x32xf32>
    %169 = arith.addf %165, %168 : vector<16x32xf32>
    %170 = arith.addf %145, %169 : vector<16x32xf32>
    %c0_69 = arith.constant 0 : index
    %c0_70 = arith.constant 0 : index
    %c0_71 = arith.constant 0 : index
    %171 = vector.load %arg16[%c0_69, %c0_70, %c0_71] : memref<1x1x32xf32, #tpu.memory_space<vmem>>, vector<1x1x32xf32>
    %172 = vector.shape_cast %171 : vector<1x1x32xf32> to vector<1x32xf32>
    %c0_72 = arith.constant 0 : index
    %c0_73 = arith.constant 0 : index
    %c0_74 = arith.constant 0 : index
    %173 = vector.load %arg17[%c0_72, %c0_73, %c0_74] : memref<1x1x32xf32, #tpu.memory_space<vmem>>, vector<1x1x32xf32>
    %174 = vector.shape_cast %173 : vector<1x1x32xf32> to vector<1x32xf32>
    %cst_75 = arith.constant dense<0.000000e+00> : vector<16xf32>
    %175 = vector.multi_reduction <add>, %170, %cst_75 [1] : vector<16x32xf32> to vector<16xf32>
    %176 = vector.shape_cast %175 : vector<16xf32> to vector<16x1xf32>
    %cst_76 = arith.constant 3.200000e+01 : f32
    %177 = vector.broadcast %cst_76 : f32 to vector<16x1xf32>
    %178 = arith.divf %176, %177 : vector<16x1xf32>
    %179 = vector.broadcast %178 : vector<16x1xf32> to vector<16x32xf32>
    %180 = arith.subf %170, %179 : vector<16x32xf32>
    %181 = arith.mulf %180, %180 : vector<16x32xf32>
    %cst_77 = arith.constant dense<0.000000e+00> : vector<16xf32>
    %182 = vector.multi_reduction <add>, %181, %cst_77 [1] : vector<16x32xf32> to vector<16xf32>
    %183 = vector.shape_cast %182 : vector<16xf32> to vector<16x1xf32>
    %cst_78 = arith.constant 3.200000e+01 : f32
    %184 = vector.broadcast %cst_78 : f32 to vector<16x1xf32>
    %185 = arith.divf %183, %184 : vector<16x1xf32>
    %186 = vector.broadcast %178 : vector<16x1xf32> to vector<16x32xf32>
    %187 = arith.subf %170, %186 : vector<16x32xf32>
    %cst_79 = arith.constant 9.99999974E-6 : f32
    %188 = vector.broadcast %cst_79 : f32 to vector<16x1xf32>
    %189 = arith.addf %185, %188 : vector<16x1xf32>
    %190 = math.rsqrt %189 : vector<16x1xf32>
    %191 = vector.broadcast %190 : vector<16x1xf32> to vector<16x32xf32>
    %192 = arith.mulf %187, %191 : vector<16x32xf32>
    %193 = vector.broadcast %172 : vector<1x32xf32> to vector<16x32xf32>
    %194 = arith.mulf %192, %193 : vector<16x32xf32>
    %195 = vector.broadcast %174 : vector<1x32xf32> to vector<16x32xf32>
    %196 = arith.addf %194, %195 : vector<16x32xf32>
    %c0_80 = arith.constant 0 : index
    %c0_81 = arith.constant 0 : index
    %197 = vector.load %arg19[%c0_80, %c0_81] : memref<16x32xf32, #tpu.memory_space<vmem>>, vector<16x32xf32>
    tpu.vector_store %arg19[%c0_80, %c0_81], %196 {strides = array<i32>} : memref<16x32xf32, #tpu.memory_space<vmem>>, vector<16x32xf32>,
    %c1_i32 = arith.constant 1 : i32
    %198 = arith.cmpi eq, %arg1, %c1_i32 : i32
    %199 = arith.extui %198 : i1 to i32
    %c0_i32_82 = arith.constant 0 : i32
    %200 = arith.cmpi ne, %199, %c0_i32_82 : i32
    scf.if %200 {
      %c0_83 = arith.constant 0 : index
      %c0_84 = arith.constant 0 : index
      %c0_85 = arith.constant 0 : index
      %201 = vector.load %arg18[%c0_83, %c0_84, %c0_85] : memref<1x16x32xf32, #tpu.memory_space<vmem>>, vector<1x16x32xf32>
      %202 = vector.shape_cast %201 : vector<1x16x32xf32> to vector<16x32xf32>
      %203 = vector.shape_cast %196 : vector<16x32xf32> to vector<1x16x32xf32>
      tpu.vector_store %arg18[%c0_83, %c0_84, %c0_85], %203 {strides = array<i32>} : memref<1x16x32xf32, #tpu.memory_space<vmem>>, vector<1x16x32xf32>,
    } else {
    }
    return
  }
  func.func @transform_0(%arg0: i32, %arg1: i32) -> (i32, i32, i32) {
    %c0_i32 = arith.constant 0 : i32
    %c0_i32_0 = arith.constant 0 : i32
    %c0_i32_1 = arith.constant 0 : i32
    return %arg0, %c0_i32, %c0_i32_0 : i32, i32, i32
  }
  func.func @transform_1(%arg0: i32, %arg1: i32) -> (i32, i32, i32) {
    %c0_i32 = arith.constant 0 : i32
    %c0_i32_0 = arith.constant 0 : i32
    %c0_i32_1 = arith.constant 0 : i32
    return %arg0, %c0_i32, %c0_i32_0 : i32, i32, i32
  }
  func.func @transform_2(%arg0: i32, %arg1: i32) -> (i32, i32) {
    %c0_i32 = arith.constant 0 : i32
    %c0_i32_0 = arith.constant 0 : i32
    %c0_i32_1 = arith.constant 0 : i32
    return %c0_i32, %c0_i32_0 : i32, i32
  }
  func.func @transform_3(%arg0: i32, %arg1: i32) -> (i32, i32) {
    %c0_i32 = arith.constant 0 : i32
    %c0_i32_0 = arith.constant 0 : i32
    %c0_i32_1 = arith.constant 0 : i32
    return %c0_i32, %c0_i32_0 : i32, i32
  }
  func.func @transform_4(%arg0: i32, %arg1: i32) -> (i32, i32, i32) {
    %c0_i32 = arith.constant 0 : i32
    %c0_i32_0 = arith.constant 0 : i32
    %c0_i32_1 = arith.constant 0 : i32
    return %arg1, %c0_i32, %c0_i32_0 : i32, i32, i32
  }
  func.func @transform_5(%arg0: i32, %arg1: i32) -> (i32, i32, i32) {
    %c0_i32 = arith.constant 0 : i32
    %c0_i32_0 = arith.constant 0 : i32
    %c0_i32_1 = arith.constant 0 : i32
    return %arg1, %c0_i32, %c0_i32_0 : i32, i32, i32
  }
  func.func @transform_6(%arg0: i32, %arg1: i32) -> (i32, i32, i32) {
    %c0_i32 = arith.constant 0 : i32
    %c0_i32_0 = arith.constant 0 : i32
    %c0_i32_1 = arith.constant 0 : i32
    return %arg1, %c0_i32, %c0_i32_0 : i32, i32, i32
  }
  func.func @transform_7(%arg0: i32, %arg1: i32) -> (i32, i32, i32) {
    %c0_i32 = arith.constant 0 : i32
    %c0_i32_0 = arith.constant 0 : i32
    %c0_i32_1 = arith.constant 0 : i32
    return %arg1, %c0_i32, %c0_i32_0 : i32, i32, i32
  }
  func.func @transform_8(%arg0: i32, %arg1: i32) -> (i32, i32, i32) {
    %c0_i32 = arith.constant 0 : i32
    %c0_i32_0 = arith.constant 0 : i32
    %c0_i32_1 = arith.constant 0 : i32
    return %arg1, %c0_i32, %c0_i32_0 : i32, i32, i32
  }
  func.func @transform_9(%arg0: i32, %arg1: i32) -> (i32, i32, i32) {
    %c0_i32 = arith.constant 0 : i32
    %c0_i32_0 = arith.constant 0 : i32
    %c0_i32_1 = arith.constant 0 : i32
    return %arg1, %c0_i32, %c0_i32_0 : i32, i32, i32
  }
  func.func @transform_10(%arg0: i32, %arg1: i32) -> (i32, i32, i32) {
    %c0_i32 = arith.constant 0 : i32
    %c0_i32_0 = arith.constant 0 : i32
    %c0_i32_1 = arith.constant 0 : i32
    return %arg1, %c0_i32, %c0_i32_0 : i32, i32, i32
  }
  func.func @transform_11(%arg0: i32, %arg1: i32) -> (i32, i32, i32) {
    %c0_i32 = arith.constant 0 : i32
    %c0_i32_0 = arith.constant 0 : i32
    %c0_i32_1 = arith.constant 0 : i32
    return %arg1, %c0_i32, %c0_i32_0 : i32, i32, i32
  }
  func.func @transform_12(%arg0: i32, %arg1: i32) -> (i32, i32, i32) {
    %c0_i32 = arith.constant 0 : i32
    %c0_i32_0 = arith.constant 0 : i32
    %c0_i32_1 = arith.constant 0 : i32
    return %arg1, %c0_i32, %c0_i32_0 : i32, i32, i32
  }
  func.func @transform_13(%arg0: i32, %arg1: i32) -> (i32, i32, i32) {
    %c0_i32 = arith.constant 0 : i32
    %c0_i32_0 = arith.constant 0 : i32
    %c0_i32_1 = arith.constant 0 : i32
    return %arg1, %c0_i32, %c0_i32_0 : i32, i32, i32
  }
  func.func @transform_14(%arg0: i32, %arg1: i32) -> (i32, i32, i32) {
    %c0_i32 = arith.constant 0 : i32
    %c0_i32_0 = arith.constant 0 : i32
    %c0_i32_1 = arith.constant 0 : i32
    return %arg1, %c0_i32, %c0_i32_0 : i32, i32, i32
  }
  func.func @transform_15(%arg0: i32, %arg1: i32) -> (i32, i32, i32) {
    %c0_i32 = arith.constant 0 : i32
    %c0_i32_0 = arith.constant 0 : i32
    %c0_i32_1 = arith.constant 0 : i32
    return %arg1, %c0_i32, %c0_i32_0 : i32, i32, i32
  }
  func.func @transform_16(%arg0: i32, %arg1: i32) -> (i32, i32, i32) {
    %c0_i32 = arith.constant 0 : i32
    %c0_i32_0 = arith.constant 0 : i32
    %c0_i32_1 = arith.constant 0 : i32
    return %arg0, %c0_i32, %c0_i32_0 : i32, i32, i32
  }
}

</mosaic_0001>

<llo_original>
// kernel: tpu_custom_call.1
$region0: #{tpu_custom_call.1}
  #allocation0 [shape = 'u32[]', space=smem, size = 0x4, offset = 0x4, fixed_abs, tag = 'smem constant byte address 0x4 - core index']
  #allocation1 [shape = 'u32[72,128]{1,0:T(1,128)}', space=vmem, size = 0x9000, scoped, tag = 'internal scratch']
  #allocation2 [shape = 'f32[16,32]{1,0:T(8,128)}', space=vmem, size = 0x2000, scoped, tag = 'scratch operand']
  %s0 = inlined_call_operand.vmem [shape: f32[2,16,32], index: 0, kind: input, shape index: {}]
  %s1 = inlined_call_operand.hbm [shape: f32[2,1,16], index: 1, kind: input, shape index: {}]
  %s2 = inlined_call_operand.vmem [shape: f32[1,32], index: 2, kind: input, shape index: {}]
  %s3 = inlined_call_operand.hbm [shape: f32[1,32], index: 3, kind: input, shape index: {}]
  %s4 = inlined_call_operand.vmem [shape: bf16[2,32,96], index: 4, kind: input, shape index: {}]
  %s5 = inlined_call_operand.vmem [shape: f32[2,1,96], index: 5, kind: input, shape index: {}]
  %s6 = inlined_call_operand.vmem [shape: bf16[2,32,32], index: 6, kind: input, shape index: {}]
  %s7 = inlined_call_operand.vmem [shape: f32[2,1,32], index: 7, kind: input, shape index: {}]
  %s8 = inlined_call_operand.vmem [shape: f32[2,1,32], index: 8, kind: input, shape index: {}]
  %s9 = inlined_call_operand.hbm [shape: f32[2,1,32], index: 9, kind: input, shape index: {}]
  %s10 = inlined_call_operand.hbm [shape: bf16[2,32,64], index: 10, kind: input, shape index: {}]
  %s11 = inlined_call_operand.vmem [shape: f32[2,1,64], index: 11, kind: input, shape index: {}]
  %s12 = inlined_call_operand.vmem [shape: bf16[2,64,32], index: 12, kind: input, shape index: {}]
  %s13 = inlined_call_operand.vmem [shape: f32[2,1,32], index: 13, kind: input, shape index: {}]
  %s14 = inlined_call_operand.vmem [shape: f32[2,1,32], index: 14, kind: input, shape index: {}]
  %s15 = inlined_call_operand.hbm [shape: f32[2,1,32], index: 15, kind: input, shape index: {}]
  %s16 = inlined_call_operand.hbm [shape: f32[2,16,32], index: 16, kind: output, shape index: {}]
  %s17 = sld [smem:[#allocation0]]
  $region125: #{tpu_custom_call.1} parent=0
    _
  %s19 = ssub.s32 1, %s17
  %s20 = scalar_select 0, %s19, %s17
  $region1: #{tpu_custom_call.1} parent=0
    #allocation3 [shape = 'u8[1024]{0}', space=vmem, size = 0x400, scoped, tag = 'input window, operand 1']
    #allocation4 [shape = 's32[2]{0}', space=sflag, size = 0x8, scoped, tag = 'scoped memory for tpu_custom_call.1']
    #allocation5 [shape = 's32[2]{0}', space=sflag, size = 0x8, scoped, tag = 'scoped memory for tpu_custom_call.1']
    #allocation6 [shape = 'u8[512]{0}', space=vmem, size = 0x400, scoped, tag = 'input window, operand 3, single buffered']
    #allocation7 [shape = 's32[1]{0}', space=sflag, size = 0x4, scoped, tag = 'scoped memory for tpu_custom_call.1']
    #allocation8 [shape = 'u8[1024]{0}', space=vmem, size = 0x400, scoped, tag = 'input window, operand 9']
    #allocation9 [shape = 'u8[16384]{0}', space=vmem, size = 0x4000, scoped, tag = 'input window, operand 10']
    #allocation10 [shape = 'u8[1024]{0}', space=vmem, size = 0x400, scoped, tag = 'input window, operand 15']
    #allocation11 [shape = 'u8[16384]{0}', space=vmem, size = 0x4000, scoped, tag = 'output window, operand 0']
    %21 = vsyncpa [#allocation4], 0
    %s22 = scalar_lea.sflag [#allocation4], 1
    %23 = vsyncpa %s22, 0
    %24 = vsyncpa [#allocation7], 0
    %25 = vsyncpa [#allocation5], 0
    %s26 = scalar_lea.sflag [#allocation5], 1
    %27 = vsyncpa %s26, 0
    loop: start=0, step=1, limit=6
    $region2: #{tpu_custom_call.1} parent=1 // loop_pre_header
      _
    $region3: #{tpu_custom_call.1} parent=1 // loop_header
      %s29 = sphi 0, %s33
      %p30 = scmp.ge.s32.totalorder %s29, 6
      %s36 = sphi 0, %s48
      %s37 = sphi 0, %s44
      %s38 = sphi 0, %s36
      %s39 = sphi 0, %s37
      %s40 = sphi 0, %s38
      %s41 = sphi 0, %s39
      %s51 = sphi 0, %s53
      %s54 = sphi 0, %s51
      %s55 = sphi 0, %s54
      %s71 = sphi 0, %s55
      %s77 = sphi 0, %s79
      %s80 = sphi 0, %s77
      %s81 = sphi 0, %s80
      %s97 = sphi 0, %s81
      %s101 = sphi 0, %s101
      %s103 = sphi 0, %s101
      %s104 = sphi 0, %s103
      %s118 = sphi 0, %s104
      %s122 = sphi 0, %s122
      %s124 = sphi 0, %s122
      %s125 = sphi 0, %s124
      %s139 = sphi 0, %s125
      %s145 = sphi 0, %s147
      %s148 = sphi 0, %s145
      %s149 = sphi 0, %s148
      %s165 = sphi 0, %s149
      %s171 = sphi 0, %s173
      %s174 = sphi 0, %s171
      %s175 = sphi 0, %s174
      %s191 = sphi 0, %s175
      %s197 = sphi 0, %s199
      %s200 = sphi 0, %s197
      %s201 = sphi 0, %s200
      %s217 = sphi 0, %s201
      %s223 = sphi 0, %s225
      %s226 = sphi 0, %s223
      %s227 = sphi 0, %s226
      %s243 = sphi 0, %s227
      %s249 = sphi 0, %s251
      %s252 = sphi 0, %s249
      %s253 = sphi 0, %s252
      %s269 = sphi 0, %s253
      %s275 = sphi 0, %s277
      %s278 = sphi 0, %s275
      %s279 = sphi 0, %s278
      %s295 = sphi 0, %s279
      %s301 = sphi 0, %s303
      %s304 = sphi 0, %s301
      %s305 = sphi 0, %s304
      %s321 = sphi 0, %s305
      %s327 = sphi 0, %s329
      %s330 = sphi 0, %s327
      %s331 = sphi 0, %s330
      %s347 = sphi 0, %s331
      %s353 = sphi 0, %s355
      %s356 = sphi 0, %s353
      %s357 = sphi 0, %s356
      %s373 = sphi 0, %s357
      %s379 = sphi 0, %s381
      %s382 = sphi 0, %s379
      %s383 = sphi 0, %s382
      %s399 = sphi 0, %s383
      %s405 = sphi 0, %s407
      %s408 = sphi 0, %s405
      %s409 = sphi 0, %s408
      %s425 = sphi 0, %s409
      %s431 = sphi 0, %s433
      %s434 = sphi 0, %s431
      %s435 = sphi 0, %s434
      %s451 = sphi 0, %s435
      %s457 = sphi 0, %s459
      %s460 = sphi 0, %s457
      %s461 = sphi 0, %s460
      %s477 = sphi 0, %s461
    $region4: #{tpu_custom_call.1} parent=1 // loop_header_branch
      %32 = sbr.rel (%p30) target = $region8
    $region5: #{tpu_custom_call.1} parent=1 // loop_body
      %s34 = ssub.s32 %s29, 1
      %s35 = ssub.s32 %s29, 2
      %s42 = sadd.s32 1, %s37
      %p43 = scmp.ge.s32.totalorder %s42, 2
      %s44 = scalar_select %p43, 0, %s42
      %s45 = sadd.s32 1, %s36
      %s46 = scalar_select %p43, %s45, %s36
      %p47 = scmp.ge.s32.totalorder %s46, 2
      %s48 = scalar_select %p47, 0, %s46
      %s49 = ssub.s32 %s36, %s48
      %p50 = scmp.eq.s32.totalorder %s49, 0
      %s52 = sadd.s32 %s51, 1
      %s53 = scalar_select %p50, %s51, %s52
      %p56 = pneg %p50
      %p57 = scmp.eq.s32.totalorder %s29, 3
      %p58 = por %p56, %p57
      %p59 = scmp.ne.s32.totalorder %s51, %s54
      %p60 = scmp.eq.s32.totalorder %s29, 0
      %p61 = por %p59, %p60
      %p62 = scmp.ne.s32.totalorder %s51, %s54
      %p63 = scmp.eq.s32.totalorder %s34, 3
      %p64 = por %p62, %p63
      %p65 = scmp.ne.s32.totalorder %s54, %s55
      %p66 = scmp.eq.s32.totalorder %s34, 0
      %p67 = por %p65, %p66
      %p68 = scmp.ne.s32.totalorder %s54, %s55
      %p69 = scmp.eq.s32.totalorder %s35, 3
      %p70 = por %p68, %p69
      %p72 = scmp.ne.s32.totalorder %s55, %s71
      %p73 = scmp.eq.s32.totalorder %s35, 0
      %p74 = por %p72, %p73
      %s75 = ssub.s32 %s36, %s48
      %p76 = scmp.eq.s32.totalorder %s75, 0
      %s78 = sadd.s32 %s77, 1
      %s79 = scalar_select %p76, %s77, %s78
      %p82 = pneg %p76
      %p83 = scmp.eq.s32.totalorder %s29, 3
      %p84 = por %p82, %p83
      %p85 = scmp.ne.s32.totalorder %s77, %s80
      %p86 = scmp.eq.s32.totalorder %s29, 0
      %p87 = por %p85, %p86
      %p88 = scmp.ne.s32.totalorder %s77, %s80
      %p89 = scmp.eq.s32.totalorder %s34, 3
      %p90 = por %p88, %p89
      %p91 = scmp.ne.s32.totalorder %s80, %s81
      %p92 = scmp.eq.s32.totalorder %s34, 0
      %p93 = por %p91, %p92
      %p94 = scmp.ne.s32.totalorder %s80, %s81
      %p95 = scmp.eq.s32.totalorder %s35, 3
      %p96 = por %p94, %p95
      %p98 = scmp.ne.s32.totalorder %s81, %s97
      %p99 = scmp.eq.s32.totalorder %s35, 0
      %p100 = por %p98, %p99
      %s102 = sadd.s32 %s101, 1
      %p105 = scmp.eq.s32.totalorder %s29, 3
      %p106 = scmp.ne.s32.totalorder %s101, %s103
      %p107 = scmp.eq.s32.totalorder %s29, 0
      %p108 = por %p106, %p107
      %p109 = scmp.ne.s32.totalorder %s101, %s103
      %p110 = scmp.eq.s32.totalorder %s34, 3
      %p111 = por %p109, %p110
      %p112 = scmp.ne.s32.totalorder %s103, %s104
      %p113 = scmp.eq.s32.totalorder %s34, 0
      %p114 = por %p112, %p113
      %p115 = scmp.ne.s32.totalorder %s103, %s104
      %p116 = scmp.eq.s32.totalorder %s35, 3
      %p117 = por %p115, %p116
      %p119 = scmp.ne.s32.totalorder %s104, %s118
      %p120 = scmp.eq.s32.totalorder %s35, 0
      %p121 = por %p119, %p120
      %s123 = sadd.s32 %s122, 1
      %p126 = scmp.eq.s32.totalorder %s29, 3
      %p127 = scmp.ne.s32.totalorder %s122, %s124
      %p128 = scmp.eq.s32.totalorder %s29, 0
      %p129 = por %p127, %p128
      %p130 = scmp.ne.s32.totalorder %s122, %s124
      %p131 = scmp.eq.s32.totalorder %s34, 3
      %p132 = por %p130, %p131
      %p133 = scmp.ne.s32.totalorder %s124, %s125
      %p134 = scmp.eq.s32.totalorder %s34, 0
      %p135 = por %p133, %p134
      %p136 = scmp.ne.s32.totalorder %s124, %s125
      %p137 = scmp.eq.s32.totalorder %s35, 3
      %p138 = por %p136, %p137
      %p140 = scmp.ne.s32.totalorder %s125, %s139
      %p141 = scmp.eq.s32.totalorder %s35, 0
      %p142 = por %p140, %p141
      %s143 = ssub.s32 %s37, %s44
      %p144 = scmp.eq.s32.totalorder %s143, 0
      %s146 = sadd.s32 %s145, 1
      %s147 = scalar_select %p144, %s145, %s146
      %p150 = pneg %p144
      %p151 = scmp.eq.s32.totalorder %s29, 3
      %p152 = por %p150, %p151
      %p153 = scmp.ne.s32.totalorder %s145, %s148
      %p154 = scmp.eq.s32.totalorder %s29, 0
      %p155 = por %p153, %p154
      %p156 = scmp.ne.s32.totalorder %s145, %s148
      %p157 = scmp.eq.s32.totalorder %s34, 3
      %p158 = por %p156, %p157
      %p159 = scmp.ne.s32.totalorder %s148, %s149
      %p160 = scmp.eq.s32.totalorder %s34, 0
      %p161 = por %p159, %p160
      %p162 = scmp.ne.s32.totalorder %s148, %s149
      %p163 = scmp.eq.s32.totalorder %s35, 3
      %p164 = por %p162, %p163
      %p166 = scmp.ne.s32.totalorder %s149, %s165
      %p167 = scmp.eq.s32.totalorder %s35, 0
      %p168 = por %p166, %p167
      %s169 = ssub.s32 %s37, %s44
      %p170 = scmp.eq.s32.totalorder %s169, 0
      %s172 = sadd.s32 %s171, 1
      %s173 = scalar_select %p170, %s171, %s172
      %p176 = pneg %p170
      %p177 = scmp.eq.s32.totalorder %s29, 3
      %p178 = por %p176, %p177
      %p179 = scmp.ne.s32.totalorder %s171, %s174
      %p180 = scmp.eq.s32.totalorder %s29, 0
      %p181 = por %p179, %p180
      %p182 = scmp.ne.s32.totalorder %s171, %s174
      %p183 = scmp.eq.s32.totalorder %s34, 3
      %p184 = por %p182, %p183
      %p185 = scmp.ne.s32.totalorder %s174, %s175
      %p186 = scmp.eq.s32.totalorder %s34, 0
      %p187 = por %p185, %p186
      %p188 = scmp.ne.s32.totalorder %s174, %s175
      %p189 = scmp.eq.s32.totalorder %s35, 3
      %p190 = por %p188, %p189
      %p192 = scmp.ne.s32.totalorder %s175, %s191
      %p193 = scmp.eq.s32.totalorder %s35, 0
      %p194 = por %p192, %p193
      %s195 = ssub.s32 %s37, %s44
      %p196 = scmp.eq.s32.totalorder %s195, 0
      %s198 = sadd.s32 %s197, 1
      %s199 = scalar_select %p196, %s197, %s198
      %p202 = pneg %p196
      %p203 = scmp.eq.s32.totalorder %s29, 3
      %p204 = por %p202, %p203
      %p205 = scmp.ne.s32.totalorder %s197, %s200
      %p206 = scmp.eq.s32.totalorder %s29, 0
      %p207 = por %p205, %p206
      %p208 = scmp.ne.s32.totalorder %s197, %s200
      %p209 = scmp.eq.s32.totalorder %s34, 3
      %p210 = por %p208, %p209
      %p211 = scmp.ne.s32.totalorder %s200, %s201
      %p212 = scmp.eq.s32.totalorder %s34, 0
      %p213 = por %p211, %p212
      %p214 = scmp.ne.s32.totalorder %s200, %s201
      %p215 = scmp.eq.s32.totalorder %s35, 3
      %p216 = por %p214, %p215
      %p218 = scmp.ne.s32.totalorder %s201, %s217
      %p219 = scmp.eq.s32.totalorder %s35, 0
      %p220 = por %p218, %p219
      %s221 = ssub.s32 %s37, %s44
      %p222 = scmp.eq.s32.totalorder %s221, 0
      %s224 = sadd.s32 %s223, 1
      %s225 = scalar_select %p222, %s223, %s224
      %p228 = pneg %p222
      %p229 = scmp.eq.s32.totalorder %s29, 3
      %p230 = por %p228, %p229
      %p231 = scmp.ne.s32.totalorder %s223, %s226
      %p232 = scmp.eq.s32.totalorder %s29, 0
      %p233 = por %p231, %p232
      %p234 = scmp.ne.s32.totalorder %s223, %s226
      %p235 = scmp.eq.s32.totalorder %s34, 3
      %p236 = por %p234, %p235
      %p237 = scmp.ne.s32.totalorder %s226, %s227
      %p238 = scmp.eq.s32.totalorder %s34, 0
      %p239 = por %p237, %p238
      %p240 = scmp.ne.s32.totalorder %s226, %s227
      %p241 = scmp.eq.s32.totalorder %s35, 3
      %p242 = por %p240, %p241
      %p244 = scmp.ne.s32.totalorder %s227, %s243
      %p245 = scmp.eq.s32.totalorder %s35, 0
      %p246 = por %p244, %p245
      %s247 = ssub.s32 %s37, %s44
      %p248 = scmp.eq.s32.totalorder %s247, 0
      %s250 = sadd.s32 %s249, 1
      %s251 = scalar_select %p248, %s249, %s250
      %p254 = pneg %p248
      %p255 = scmp.eq.s32.totalorder %s29, 3
      %p256 = por %p254, %p255
      %p257 = scmp.ne.s32.totalorder %s249, %s252
      %p258 = scmp.eq.s32.totalorder %s29, 0
      %p259 = por %p257, %p258
      %p260 = scmp.ne.s32.totalorder %s249, %s252
      %p261 = scmp.eq.s32.totalorder %s34, 3
      %p262 = por %p260, %p261
      %p263 = scmp.ne.s32.totalorder %s252, %s253
      %p264 = scmp.eq.s32.totalorder %s34, 0
      %p265 = por %p263, %p264
      %p266 = scmp.ne.s32.totalorder %s252, %s253
      %p267 = scmp.eq.s32.totalorder %s35, 3
      %p268 = por %p266, %p267
      %p270 = scmp.ne.s32.totalorder %s253, %s269
      %p271 = scmp.eq.s32.totalorder %s35, 0
      %p272 = por %p270, %p271
      %s273 = ssub.s32 %s37, %s44
      %p274 = scmp.eq.s32.totalorder %s273, 0
      %s276 = sadd.s32 %s275, 1
      %s277 = scalar_select %p274, %s275, %s276
      %p280 = pneg %p274
      %p281 = scmp.eq.s32.totalorder %s29, 3
      %p282 = por %p280, %p281
      %p283 = scmp.ne.s32.totalorder %s275, %s278
      %p284 = scmp.eq.s32.totalorder %s29, 0
      %p285 = por %p283, %p284
      %p286 = scmp.ne.s32.totalorder %s275, %s278
      %p287 = scmp.eq.s32.totalorder %s34, 3
      %p288 = por %p286, %p287
      %p289 = scmp.ne.s32.totalorder %s278, %s279
      %p290 = scmp.eq.s32.totalorder %s34, 0
      %p291 = por %p289, %p290
      %p292 = scmp.ne.s32.totalorder %s278, %s279
      %p293 = scmp.eq.s32.totalorder %s35, 3
      %p294 = por %p292, %p293
      %p296 = scmp.ne.s32.totalorder %s279, %s295
      %p297 = scmp.eq.s32.totalorder %s35, 0
      %p298 = por %p296, %p297
      %s299 = ssub.s32 %s37, %s44
      %p300 = scmp.eq.s32.totalorder %s299, 0
      %s302 = sadd.s32 %s301, 1
      %s303 = scalar_select %p300, %s301, %s302
      %p306 = pneg %p300
      %p307 = scmp.eq.s32.totalorder %s29, 3
      %p308 = por %p306, %p307
      %p309 = scmp.ne.s32.totalorder %s301, %s304
      %p310 = scmp.eq.s32.totalorder %s29, 0
      %p311 = por %p309, %p310
      %p312 = scmp.ne.s32.totalorder %s301, %s304
      %p313 = scmp.eq.s32.totalorder %s34, 3
      %p314 = por %p312, %p313
      %p315 = scmp.ne.s32.totalorder %s304, %s305
      %p316 = scmp.eq.s32.totalorder %s34, 0
      %p317 = por %p315, %p316
      %p318 = scmp.ne.s32.totalorder %s304, %s305
      %p319 = scmp.eq.s32.totalorder %s35, 3
      %p320 = por %p318, %p319
      %p322 = scmp.ne.s32.totalorder %s305, %s321
      %p323 = scmp.eq.s32.totalorder %s35, 0
      %p324 = por %p322, %p323
      %s325 = ssub.s32 %s37, %s44
      %p326 = scmp.eq.s32.totalorder %s325, 0
      %s328 = sadd.s32 %s327, 1
      %s329 = scalar_select %p326, %s327, %s328
      %p332 = pneg %p326
      %p333 = scmp.eq.s32.totalorder %s29, 3
      %p334 = por %p332, %p333
      %p335 = scmp.ne.s32.totalorder %s327, %s330
      %p336 = scmp.eq.s32.totalorder %s29, 0
      %p337 = por %p335, %p336
      %p338 = scmp.ne.s32.totalorder %s327, %s330
      %p339 = scmp.eq.s32.totalorder %s34, 3
      %p340 = por %p338, %p339
      %p341 = scmp.ne.s32.totalorder %s330, %s331
      %p342 = scmp.eq.s32.totalorder %s34, 0
      %p343 = por %p341, %p342
      %p344 = scmp.ne.s32.totalorder %s330, %s331
      %p345 = scmp.eq.s32.totalorder %s35, 3
      %p346 = por %p344, %p345
      %p348 = scmp.ne.s32.totalorder %s331, %s347
      %p349 = scmp.eq.s32.totalorder %s35, 0
      %p350 = por %p348, %p349
      %s351 = ssub.s32 %s37, %s44
      %p352 = scmp.eq.s32.totalorder %s351, 0
      %s354 = sadd.s32 %s353, 1
      %s355 = scalar_select %p352, %s353, %s354
      %p358 = pneg %p352
      %p359 = scmp.eq.s32.totalorder %s29, 3
      %p360 = por %p358, %p359
      %p361 = scmp.ne.s32.totalorder %s353, %s356
      %p362 = scmp.eq.s32.totalorder %s29, 0
      %p363 = por %p361, %p362
      %p364 = scmp.ne.s32.totalorder %s353, %s356
      %p365 = scmp.eq.s32.totalorder %s34, 3
      %p366 = por %p364, %p365
      %p367 = scmp.ne.s32.totalorder %s356, %s357
      %p368 = scmp.eq.s32.totalorder %s34, 0
      %p369 = por %p367, %p368
      %p370 = scmp.ne.s32.totalorder %s356, %s357
      %p371 = scmp.eq.s32.totalorder %s35, 3
      %p372 = por %p370, %p371
      %p374 = scmp.ne.s32.totalorder %s357, %s373
      %p375 = scmp.eq.s32.totalorder %s35, 0
      %p376 = por %p374, %p375
      %s377 = ssub.s32 %s37, %s44
      %p378 = scmp.eq.s32.totalorder %s377, 0
      %s380 = sadd.s32 %s379, 1
      %s381 = scalar_select %p378, %s379, %s380
      %p384 = pneg %p378
      %p385 = scmp.eq.s32.totalorder %s29, 3
      %p386 = por %p384, %p385
      %p387 = scmp.ne.s32.totalorder %s379, %s382
      %p388 = scmp.eq.s32.totalorder %s29, 0
      %p389 = por %p387, %p388
      %p390 = scmp.ne.s32.totalorder %s379, %s382
      %p391 = scmp.eq.s32.totalorder %s34, 3
      %p392 = por %p390, %p391
      %p393 = scmp.ne.s32.totalorder %s382, %s383
      %p394 = scmp.eq.s32.totalorder %s34, 0
      %p395 = por %p393, %p394
      %p396 = scmp.ne.s32.totalorder %s382, %s383
      %p397 = scmp.eq.s32.totalorder %s35, 3
      %p398 = por %p396, %p397
      %p400 = scmp.ne.s32.totalorder %s383, %s399
      %p401 = scmp.eq.s32.totalorder %s35, 0
      %p402 = por %p400, %p401
      %s403 = ssub.s32 %s37, %s44
      %p404 = scmp.eq.s32.totalorder %s403, 0
      %s406 = sadd.s32 %s405, 1
      %s407 = scalar_select %p404, %s405, %s406
      %p410 = pneg %p404
      %p411 = scmp.eq.s32.totalorder %s29, 3
      %p412 = por %p410, %p411
      %p413 = scmp.ne.s32.totalorder %s405, %s408
      %p414 = scmp.eq.s32.totalorder %s29, 0
      %p415 = por %p413, %p414
      %p416 = scmp.ne.s32.totalorder %s405, %s408
      %p417 = scmp.eq.s32.totalorder %s34, 3
      %p418 = por %p416, %p417
      %p419 = scmp.ne.s32.totalorder %s408, %s409
      %p420 = scmp.eq.s32.totalorder %s34, 0
      %p421 = por %p419, %p420
      %p422 = scmp.ne.s32.totalorder %s408, %s409
      %p423 = scmp.eq.s32.totalorder %s35, 3
      %p424 = por %p422, %p423
      %p426 = scmp.ne.s32.totalorder %s409, %s425
      %p427 = scmp.eq.s32.totalorder %s35, 0
      %p428 = por %p426, %p427
      %s429 = ssub.s32 %s37, %s44
      %p430 = scmp.eq.s32.totalorder %s429, 0
      %s432 = sadd.s32 %s431, 1
      %s433 = scalar_select %p430, %s431, %s432
      %p436 = pneg %p430
      %p437 = scmp.eq.s32.totalorder %s29, 3
      %p438 = por %p436, %p437
      %p439 = scmp.ne.s32.totalorder %s431, %s434
      %p440 = scmp.eq.s32.totalorder %s29, 0
      %p441 = por %p439, %p440
      %p442 = scmp.ne.s32.totalorder %s431, %s434
      %p443 = scmp.eq.s32.totalorder %s34, 3
      %p444 = por %p442, %p443
      %p445 = scmp.ne.s32.totalorder %s434, %s435
      %p446 = scmp.eq.s32.totalorder %s34, 0
      %p447 = por %p445, %p446
      %p448 = scmp.ne.s32.totalorder %s434, %s435
      %p449 = scmp.eq.s32.totalorder %s35, 3
      %p450 = por %p448, %p449
      %p452 = scmp.ne.s32.totalorder %s435, %s451
      %p453 = scmp.eq.s32.totalorder %s35, 0
      %p454 = por %p452, %p453
      %s455 = ssub.s32 %s36, %s48
      %p456 = scmp.eq.s32.totalorder %s455, 0
      %s458 = sadd.s32 %s457, 1
      %s459 = scalar_select %p456, %s457, %s458
      %p462 = pneg %p456
      %p463 = scmp.eq.s32.totalorder %s29, 3
      %p464 = por %p462, %p463
      %p465 = scmp.ne.s32.totalorder %s457, %s460
      %p466 = scmp.eq.s32.totalorder %s29, 0
      %p467 = por %p465, %p466
      %p468 = scmp.ne.s32.totalorder %s457, %s460
      %p469 = scmp.eq.s32.totalorder %s34, 3
      %p470 = por %p468, %p469
      %p471 = scmp.ne.s32.totalorder %s460, %s461
      %p472 = scmp.eq.s32.totalorder %s34, 0
      %p473 = por %p471, %p472
      %p474 = scmp.ne.s32.totalorder %s460, %s461
      %p475 = scmp.eq.s32.totalorder %s35, 3
      %p476 = por %p474, %p475
      %p478 = scmp.ne.s32.totalorder %s461, %s477
      %p479 = scmp.eq.s32.totalorder %s35, 0
      %p480 = por %p478, %p479
      %p481 = scmp.le.s32.totalorder 1, %s29
      %p482 = scmp.lt.s32.totalorder %s29, 5
      %p483 = pnand %p481, %p482
      %p484 = pneg %p483
      // Predicated region
      $region9: #{tpu_custom_call.1} parent=5 // pred_check
        _
      $region10: #{tpu_custom_call.1} parent=5 // pred_check_branch
        %486 = sbr.rel (%p483) target = $region12
      $region11: #{tpu_custom_call.1} parent=5 // pred_region
        %s487 = ssub.s32 %s29, 1
        // Predicated region
        $region13: #{tpu_custom_call.1} parent=11 // pred_check
          %p488 = pneg %p114
        $region14: #{tpu_custom_call.1} parent=11 // pred_check_branch
          %490 = sbr.rel (%p488) target = $region16
        $region15: #{tpu_custom_call.1} parent=11 // pred_region
          _
        $region16: #{tpu_custom_call.1} parent=11 // pred_fallthru
          _
        // Predicated region
        $region17: #{tpu_custom_call.1} parent=11 // pred_check
          %p491 = pneg %p135
        $region18: #{tpu_custom_call.1} parent=11 // pred_check_branch
          %493 = sbr.rel (%p491) target = $region20
        $region19: #{tpu_custom_call.1} parent=11 // pred_region
          %495 = vsyncadd [#allocation7], 0
          %s497 = sshll.u32 %s3, 4
          %s498 = int_to_ptr.hbm [resolvable:$true] %s497
          %s499 = sshll.u32 [#allocation6], 4
          %s500 = int_to_ptr.vmem [resolvable:$true] %s499
          %502 = dma.hbm_to_vmem [thread:$0]  %s498, 16, %s500, [#allocation7]
        $region20: #{tpu_custom_call.1} parent=11 // pred_fallthru
          _
      $region12: #{tpu_custom_call.1} parent=5 // pred_fallthru
        _
      %p503 = scmp.lt.s32.totalorder %s29, 4
      // Predicated region
      $region21: #{tpu_custom_call.1} parent=5 // pred_check
        %p504 = pneg %p503
      $region22: #{tpu_custom_call.1} parent=5 // pred_check_branch
        %506 = sbr.rel (%p504) target = $region24
      $region23: #{tpu_custom_call.1} parent=5 // pred_region
        // Predicated region
        $region25: #{tpu_custom_call.1} parent=23 // pred_check
          %p507 = pneg %p61
        $region26: #{tpu_custom_call.1} parent=23 // pred_check_branch
          %509 = sbr.rel (%p507) target = $region28
        $region27: #{tpu_custom_call.1} parent=23 // pred_region
          %p510 = scmp.lt.s32.totalorder %s36, 1
          %s511 = scalar_select %p510, %s36, 1
          %s512 = smul.addr %s511, 2
          %s513 = smul.addr %s512, 8
          %s514 = scalar_lea.vmem %s0, %s513
        $region28: #{tpu_custom_call.1} parent=23 // pred_fallthru
          _
        // Predicated region
        $region29: #{tpu_custom_call.1} parent=23 // pred_check
          %p515 = pneg %p87
        $region30: #{tpu_custom_call.1} parent=23 // pred_check_branch
          %517 = sbr.rel (%p515) target = $region32
        $region31: #{tpu_custom_call.1} parent=23 // pred_region
          %s518 = sand.u32 %s29, 1
          %s519 = scalar_lea.sflag [#allocation4], %s518
          %s520 = sand.u32 %s77, 1
          %s521 = scalar_lea.vmem [#allocation3], %s520
          %523 = vsyncadd %s519, 0
          %s524 = scalar_lea.hbm %s1, %s36
          %s526 = sshll.u32 %s524, 4
          %s527 = int_to_ptr.hbm [resolvable:$true] %s526
          %s528 = sshll.u32 %s521, 4
          %s529 = int_to_ptr.vmem [resolvable:$true] %s528
          %531 = dma.hbm_to_vmem [thread:$0]  %s527, 16, %s529, %s519
        $region32: #{tpu_custom_call.1} parent=23 // pred_fallthru
          _
        // Predicated region
        $region33: #{tpu_custom_call.1} parent=23 // pred_check
          %p532 = pneg %p155
        $region34: #{tpu_custom_call.1} parent=23 // pred_check_branch
          %534 = sbr.rel (%p532) target = $region36
        $region35: #{tpu_custom_call.1} parent=23 // pred_region
          %p535 = scmp.lt.s32.totalorder %s37, 1
          %s536 = scalar_select %p535, %s37, 1
          %s537 = smul.addr %s536, 4
          %s538 = smul.addr %s537, 4
          %s539 = scalar_lea.vmem %s4, %s538
        $region36: #{tpu_custom_call.1} parent=23 // pred_fallthru
          _
        // Predicated region
        $region37: #{tpu_custom_call.1} parent=23 // pred_check
          %p540 = pneg %p181
        $region38: #{tpu_custom_call.1} parent=23 // pred_check_branch
          %542 = sbr.rel (%p540) target = $region40
        $region39: #{tpu_custom_call.1} parent=23 // pred_region
          %p543 = scmp.lt.s32.totalorder %s37, 1
          %s544 = scalar_select %p543, %s37, 1
          %s545 = scalar_lea.vmem %s5, %s544
        $region40: #{tpu_custom_call.1} parent=23 // pred_fallthru
          _
        // Predicated region
        $region41: #{tpu_custom_call.1} parent=23 // pred_check
          %p546 = pneg %p207
        $region42: #{tpu_custom_call.1} parent=23 // pred_check_branch
          %548 = sbr.rel (%p546) target = $region44
        $region43: #{tpu_custom_call.1} parent=23 // pred_region
          %p549 = scmp.lt.s32.totalorder %s37, 1
          %s550 = scalar_select %p549, %s37, 1
          %s551 = smul.addr %s550, 4
          %s552 = smul.addr %s551, 4
          %s553 = scalar_lea.vmem %s6, %s552
        $region44: #{tpu_custom_call.1} parent=23 // pred_fallthru
          _
        // Predicated region
        $region45: #{tpu_custom_call.1} parent=23 // pred_check
          %p554 = pneg %p233
        $region46: #{tpu_custom_call.1} parent=23 // pred_check_branch
          %556 = sbr.rel (%p554) target = $region48
        $region47: #{tpu_custom_call.1} parent=23 // pred_region
          %p557 = scmp.lt.s32.totalorder %s37, 1
          %s558 = scalar_select %p557, %s37, 1
          %s559 = scalar_lea.vmem %s7, %s558
        $region48: #{tpu_custom_call.1} parent=23 // pred_fallthru
          _
        // Predicated region
        $region49: #{tpu_custom_call.1} parent=23 // pred_check
          %p560 = pneg %p259
        $region50: #{tpu_custom_call.1} parent=23 // pred_check_branch
          %562 = sbr.rel (%p560) target = $region52
        $region51: #{tpu_custom_call.1} parent=23 // pred_region
          %p563 = scmp.lt.s32.totalorder %s37, 1
          %s564 = scalar_select %p563, %s37, 1
          %s565 = scalar_lea.vmem %s8, %s564
        $region52: #{tpu_custom_call.1} parent=23 // pred_fallthru
          _
        // Predicated region
        $region53: #{tpu_custom_call.1} parent=23 // pred_check
          %p566 = pneg %p285
        $region54: #{tpu_custom_call.1} parent=23 // pred_check_branch
          %568 = sbr.rel (%p566) target = $region56
        $region55: #{tpu_custom_call.1} parent=23 // pred_region
          %s569 = sand.u32 %s29, 1
          %s570 = scalar_lea.sflag [#allocation4], %s569
          %s571 = sand.u32 %s275, 1
          %s572 = scalar_lea.vmem [#allocation8], %s571
          %574 = vsyncadd %s570, 0
          %s575 = scalar_lea.hbm %s9, %s37
          %s577 = sshll.u32 %s575, 4
          %s578 = int_to_ptr.hbm [resolvable:$true] %s577
          %s579 = sshll.u32 %s572, 4
          %s580 = int_to_ptr.vmem [resolvable:$true] %s579
          %582 = dma.hbm_to_vmem [thread:$0]  %s578, 16, %s580, %s570
        $region56: #{tpu_custom_call.1} parent=23 // pred_fallthru
          _
        // Predicated region
        $region57: #{tpu_custom_call.1} parent=23 // pred_check
          %p583 = pneg %p311
        $region58: #{tpu_custom_call.1} parent=23 // pred_check_branch
          %585 = sbr.rel (%p583) target = $region60
        $region59: #{tpu_custom_call.1} parent=23 // pred_region
          %s586 = sand.u32 %s29, 1
          %s587 = scalar_lea.sflag [#allocation4], %s586
          %s588 = sand.u32 %s301, 1
          %s589 = smul.addr %s588, 16
          %s590 = scalar_lea.vmem [#allocation9], %s589
          %592 = vsyncadd %s587, 0
          %s593 = smul.addr %s37, 4
          %s594 = smul.addr %s593, 4
          %s595 = scalar_lea.hbm %s10, %s594
          %s596 = sshll.u32 %s595, 4
          %s597 = int_to_ptr.hbm [resolvable:$true] %s596
          %s598 = sshll.u32 %s590, 4
          %s599 = int_to_ptr.vmem [resolvable:$true] %s598
          %604 = dma.hbm_to_vmem [thread:$0]  %s597, 256, %s599, %s587, 64, 64, 4
        $region60: #{tpu_custom_call.1} parent=23 // pred_fallthru
          _
        // Predicated region
        $region61: #{tpu_custom_call.1} parent=23 // pred_check
          %p605 = pneg %p337
        $region62: #{tpu_custom_call.1} parent=23 // pred_check_branch
          %607 = sbr.rel (%p605) target = $region64
        $region63: #{tpu_custom_call.1} parent=23 // pred_region
          %p608 = scmp.lt.s32.totalorder %s37, 1
          %s609 = scalar_select %p608, %s37, 1
          %s610 = scalar_lea.vmem %s11, %s609
        $region64: #{tpu_custom_call.1} parent=23 // pred_fallthru
          _
        // Predicated region
        $region65: #{tpu_custom_call.1} parent=23 // pred_check
          %p611 = pneg %p363
        $region66: #{tpu_custom_call.1} parent=23 // pred_check_branch
          %613 = sbr.rel (%p611) target = $region68
        $region67: #{tpu_custom_call.1} parent=23 // pred_region
          %p614 = scmp.lt.s32.totalorder %s37, 1
          %s615 = scalar_select %p614, %s37, 1
          %s616 = smul.addr %s615, 8
          %s617 = smul.addr %s616, 4
          %s618 = scalar_lea.vmem %s12, %s617
        $region68: #{tpu_custom_call.1} parent=23 // pred_fallthru
          _
        // Predicated region
        $region69: #{tpu_custom_call.1} parent=23 // pred_check
          %p619 = pneg %p389
        $region70: #{tpu_custom_call.1} parent=23 // pred_check_branch
          %621 = sbr.rel (%p619) target = $region72
        $region71: #{tpu_custom_call.1} parent=23 // pred_region
          %p622 = scmp.lt.s32.totalorder %s37, 1
          %s623 = scalar_select %p622, %s37, 1
          %s624 = scalar_lea.vmem %s13, %s623
        $region72: #{tpu_custom_call.1} parent=23 // pred_fallthru
          _
        // Predicated region
        $region73: #{tpu_custom_call.1} parent=23 // pred_check
          %p625 = pneg %p415
        $region74: #{tpu_custom_call.1} parent=23 // pred_check_branch
          %627 = sbr.rel (%p625) target = $region76
        $region75: #{tpu_custom_call.1} parent=23 // pred_region
          %p628 = scmp.lt.s32.totalorder %s37, 1
          %s629 = scalar_select %p628, %s37, 1
          %s630 = scalar_lea.vmem %s14, %s629
        $region76: #{tpu_custom_call.1} parent=23 // pred_fallthru
          _
        // Predicated region
        $region77: #{tpu_custom_call.1} parent=23 // pred_check
          %p631 = pneg %p441
        $region78: #{tpu_custom_call.1} parent=23 // pred_check_branch
          %633 = sbr.rel (%p631) target = $region80
        $region79: #{tpu_custom_call.1} parent=23 // pred_region
          %s634 = sand.u32 %s29, 1
          %s635 = scalar_lea.sflag [#allocation4], %s634
          %s636 = sand.u32 %s431, 1
          %s637 = scalar_lea.vmem [#allocation10], %s636
          %639 = vsyncadd %s635, 0
          %s640 = scalar_lea.hbm %s15, %s37
          %s642 = sshll.u32 %s640, 4
          %s643 = int_to_ptr.hbm [resolvable:$true] %s642
          %s644 = sshll.u32 %s637, 4
          %s645 = int_to_ptr.vmem [resolvable:$true] %s644
          %647 = dma.hbm_to_vmem [thread:$0]  %s643, 16, %s645, %s635
        $region80: #{tpu_custom_call.1} parent=23 // pred_fallthru
          _
      $region24: #{tpu_custom_call.1} parent=5 // pred_fallthru
        _
      %p648 = scmp.le.s32.totalorder 1, %s29
      %p649 = scmp.lt.s32.totalorder %s29, 5
      %p650 = pnand %p648, %p649
      %p651 = pneg %p650
      // Predicated region
      $region81: #{tpu_custom_call.1} parent=5 // pred_check
        _
      $region82: #{tpu_custom_call.1} parent=5 // pred_check_branch
        %653 = sbr.rel (%p650) target = $region84
      $region83: #{tpu_custom_call.1} parent=5 // pred_region
        %s654 = ssub.s32 %s29, 1
        %s655 = sand.u32 %s34, 1
        %s656 = scalar_lea.sflag [#allocation4], %s655
        %s657 = sand.u32 %s80, 1
        %s658 = scalar_lea.vmem [#allocation3], %s657
        // Predicated region
        $region85: #{tpu_custom_call.1} parent=83 // pred_check
          %p659 = pneg %p93
        $region86: #{tpu_custom_call.1} parent=83 // pred_check_branch
          %661 = sbr.rel (%p659) target = $region88
        $region87: #{tpu_custom_call.1} parent=83 // pred_region
          %663 = dma.done %s656, 16
        $region88: #{tpu_custom_call.1} parent=83 // pred_fallthru
          _
        // Predicated region
        $region89: #{tpu_custom_call.1} parent=83 // pred_check
          %p664 = pneg %p135
        $region90: #{tpu_custom_call.1} parent=83 // pred_check_branch
          %666 = sbr.rel (%p664) target = $region92
        $region91: #{tpu_custom_call.1} parent=83 // pred_region
          %668 = dma.done [#allocation7], 16
        $region92: #{tpu_custom_call.1} parent=83 // pred_fallthru
          _
        %s669 = sand.u32 %s34, 1
        %s670 = scalar_lea.sflag [#allocation4], %s669
        %s671 = sand.u32 %s278, 1
        %s672 = scalar_lea.vmem [#allocation8], %s671
        // Predicated region
        $region93: #{tpu_custom_call.1} parent=83 // pred_check
          %p673 = pneg %p291
        $region94: #{tpu_custom_call.1} parent=83 // pred_check_branch
          %675 = sbr.rel (%p673) target = $region96
        $region95: #{tpu_custom_call.1} parent=83 // pred_region
          %677 = dma.done %s670, 16
        $region96: #{tpu_custom_call.1} parent=83 // pred_fallthru
          _
        %s678 = sand.u32 %s34, 1
        %s679 = scalar_lea.sflag [#allocation4], %s678
        %s680 = sand.u32 %s304, 1
        %s681 = smul.addr %s680, 16
        %s682 = scalar_lea.vmem [#allocation9], %s681
        // Predicated region
        $region97: #{tpu_custom_call.1} parent=83 // pred_check
          %p683 = pneg %p317
        $region98: #{tpu_custom_call.1} parent=83 // pred_check_branch
          %685 = sbr.rel (%p683) target = $region100
        $region99: #{tpu_custom_call.1} parent=83 // pred_region
          %687 = dma.done %s679, 256
        $region100: #{tpu_custom_call.1} parent=83 // pred_fallthru
          _
        %s688 = sand.u32 %s34, 1
        %s689 = scalar_lea.sflag [#allocation4], %s688
        %s690 = sand.u32 %s434, 1
        %s691 = scalar_lea.vmem [#allocation10], %s690
        // Predicated region
        $region101: #{tpu_custom_call.1} parent=83 // pred_check
          %p692 = pneg %p447
        $region102: #{tpu_custom_call.1} parent=83 // pred_check_branch
          %694 = sbr.rel (%p692) target = $region104
        $region103: #{tpu_custom_call.1} parent=83 // pred_region
          %696 = dma.done %s689, 16
        $region104: #{tpu_custom_call.1} parent=83 // pred_fallthru
          _
        %p697 = scmp.lt.s32.totalorder %s38, 1
        %s698 = scalar_select %p697, %s38, 1
        %s699 = smul.addr %s698, 2
        %s700 = smul.addr %s699, 8
        %s701 = scalar_lea.vmem %s0, %s700
        %p702 = pneg %p67
        %p703 = pneg %p64
        %s704 = sand.u32 %s34, 1
        %s705 = scalar_lea.sflag [#allocation4], %s704
        %s706 = sand.u32 %s80, 1
        %s707 = scalar_lea.vmem [#allocation3], %s706
        %p708 = pneg %p93
        %p709 = pneg %p90
        %p710 = pneg %p114
        %p711 = pneg %p111
        %p712 = pneg %p135
        %p713 = pneg %p132
        %p714 = scmp.lt.s32.totalorder %s39, 1
        %s715 = scalar_select %p714, %s39, 1
        %s716 = smul.addr %s715, 4
        %s717 = smul.addr %s716, 4
        %s718 = scalar_lea.vmem %s4, %s717
        %p719 = pneg %p161
        %p720 = pneg %p158
        %p721 = scmp.lt.s32.totalorder %s39, 1
        %s722 = scalar_select %p721, %s39, 1
        %s723 = scalar_lea.vmem %s5, %s722
        %p724 = pneg %p187
        %p725 = pneg %p184
        %p726 = scmp.lt.s32.totalorder %s39, 1
        %s727 = scalar_select %p726, %s39, 1
        %s728 = smul.addr %s727, 4
        %s729 = smul.addr %s728, 4
        %s730 = scalar_lea.vmem %s6, %s729
        %p731 = pneg %p213
        %p732 = pneg %p210
        %p733 = scmp.lt.s32.totalorder %s39, 1
        %s734 = scalar_select %p733, %s39, 1
        %s735 = scalar_lea.vmem %s7, %s734
        %p736 = pneg %p239
        %p737 = pneg %p236
        %p738 = scmp.lt.s32.totalorder %s39, 1
        %s739 = scalar_select %p738, %s39, 1
        %s740 = scalar_lea.vmem %s8, %s739
        %p741 = pneg %p265
        %p742 = pneg %p262
        %s743 = sand.u32 %s34, 1
        %s744 = scalar_lea.sflag [#allocation4], %s743
        %s745 = sand.u32 %s278, 1
        %s746 = scalar_lea.vmem [#allocation8], %s745
        %p747 = pneg %p291
        %p748 = pneg %p288
        %s749 = sand.u32 %s34, 1
        %s750 = scalar_lea.sflag [#allocation4], %s749
        %s751 = sand.u32 %s304, 1
        %s752 = smul.addr %s751, 16
        %s753 = scalar_lea.vmem [#allocation9], %s752
        %p754 = pneg %p317
        %p755 = pneg %p314
        %p756 = scmp.lt.s32.totalorder %s39, 1
        %s757 = scalar_select %p756, %s39, 1
        %s758 = scalar_lea.vmem %s11, %s757
        %p759 = pneg %p343
        %p760 = pneg %p340
        %p761 = scmp.lt.s32.totalorder %s39, 1
        %s762 = scalar_select %p761, %s39, 1
        %s763 = smul.addr %s762, 8
        %s764 = smul.addr %s763, 4
        %s765 = scalar_lea.vmem %s12, %s764
        %p766 = pneg %p369
        %p767 = pneg %p366
        %p768 = scmp.lt.s32.totalorder %s39, 1
        %s769 = scalar_select %p768, %s39, 1
        %s770 = scalar_lea.vmem %s13, %s769
        %p771 = pneg %p395
        %p772 = pneg %p392
        %p773 = scmp.lt.s32.totalorder %s39, 1
        %s774 = scalar_select %p773, %s39, 1
        %s775 = scalar_lea.vmem %s14, %s774
        %p776 = pneg %p421
        %p777 = pneg %p418
        %s778 = sand.u32 %s34, 1
        %s779 = scalar_lea.sflag [#allocation4], %s778
        %s780 = sand.u32 %s434, 1
        %s781 = scalar_lea.vmem [#allocation10], %s780
        %p782 = pneg %p447
        %p783 = pneg %p444
        %p784 = pneg %p473
        %p785 = pneg %p470
        %s786 = sand.u32 %s460, 1
        %s787 = scalar_lea.sflag [#allocation5], %s786
        %s788 = sand.u32 %s460, 1
        %s789 = smul.addr %s788, 16
        %s790 = scalar_lea.vmem [#allocation11], %s789
        %p791 = scmp.lt.s32.totalorder %s38, 1
        %s792 = scalar_select %p791, %s38, 1
        %s793 = smul.addr %s792, 2
        %s794 = smul.addr %s793, 8
        %s795 = scalar_lea.vmem %s0, %s794
        %p796 = scmp.lt.s32.totalorder %s39, 1
        %s797 = scalar_select %p796, %s39, 1
        %s798 = smul.addr %s797, 4
        %s799 = smul.addr %s798, 4
        %s800 = scalar_lea.vmem %s4, %s799
        %p801 = scmp.lt.s32.totalorder %s39, 1
        %s802 = scalar_select %p801, %s39, 1
        %s803 = scalar_lea.vmem %s5, %s802
        %p804 = scmp.lt.s32.totalorder %s39, 1
        %s805 = scalar_select %p804, %s39, 1
        %s806 = smul.addr %s805, 4
        %s807 = smul.addr %s806, 4
        %s808 = scalar_lea.vmem %s6, %s807
        %p809 = scmp.lt.s32.totalorder %s39, 1
        %s810 = scalar_select %p809, %s39, 1
        %s811 = scalar_lea.vmem %s7, %s810
        %p812 = scmp.lt.s32.totalorder %s39, 1
        %s813 = scalar_select %p812, %s39, 1
        %s814 = scalar_lea.vmem %s8, %s813
        %p815 = scmp.lt.s32.totalorder %s39, 1
        %s816 = scalar_select %p815, %s39, 1
        %s817 = scalar_lea.vmem %s11, %s816
        %p818 = scmp.lt.s32.totalorder %s39, 1
        %s819 = scalar_select %p818, %s39, 1
        %s820 = smul.addr %s819, 8
        %s821 = smul.addr %s820, 4
        %s822 = scalar_lea.vmem %s12, %s821
        %p823 = scmp.lt.s32.totalorder %s39, 1
        %s824 = scalar_select %p823, %s39, 1
        %s825 = scalar_lea.vmem %s13, %s824
        %p826 = scmp.lt.s32.totalorder %s39, 1
        %s827 = scalar_select %p826, %s39, 1
        %s828 = scalar_lea.vmem %s14, %s827
        %p830 = scmp.eq.s32.totalorder %s39, 0
        // Predicated region
        $region105: #{tpu_custom_call.1} parent=83 // pred_check
          %p831 = pneg %p830
        $region106: #{tpu_custom_call.1} parent=83 // pred_check_branch
          %833 = sbr.rel (%p831) target = $region108
        $region107: #{tpu_custom_call.1} parent=83 // pred_region
          %v834 = vld [vmem:[%s795] sm:$0xff]
          %v835 = vld [vmem:[%s795 + $0x8] sm:$0xff]
          %v836 = vld [vmem:[%s2] sm:$0x1]
          %v837 = vld [vmem:[#allocation6] sm:$0x1]
          %vm838 = vcmask 261120
          %v839 = vsel %vm838, %v834, 0.0
          %840 = vadd.xlane.f32.xlu0 %v839
          %v841 = vpop.xlane.xlu0 %840
          %v842 = vsel %vm838, %v835, 0.0
          %843 = vadd.xlane.f32.xlu0 %v842
          %v844 = vpop.xlane.xlu0 %843
          %v845 = vrcp.pop 32.0
          %v846 = vmul.f32 32.0, %v845
          %v847 = vsub.f32 1.0, %v846
          %v848 = vmul.f32 %v845, %v847
          %v849 = vadd.f32 %v845, %v848
          %vm850 = vweird.f32 %v845
          %v851 = vsel %vm850, %v845, %v849
          %v852 = vmul.f32 %v841, %v851
          %v853 = vmul.f32 %v844, %v851
          %v854 = vsub.f32 %v834, %v852
          %v855 = vsub.f32 %v835, %v853
          %v856 = vmul.f32 %v854, %v854
          %v857 = vmul.f32 %v855, %v855
          %v858 = vsel %vm838, %v856, 0.0
          %859 = vadd.xlane.f32.xlu0 %v858
          %v860 = vpop.xlane.xlu0 %859
          %v861 = vsel %vm838, %v857, 0.0
          %862 = vadd.xlane.f32.xlu0 %v861
          %v863 = vpop.xlane.xlu0 %862
          %v864 = vmul.f32 %v860, %v851
          %v865 = vmul.f32 %v863, %v851
          %v866 = vadd.f32 %v864, 1e-05
          %v867 = vadd.f32 %v865, 1e-05
          %v868 = vrsqrt.pop %v866
          %v869 = vmul.f32 %v868, %v866
          %v870 = vmul.f32 %v869, %v868
          %v871 = vmul.f32 0.5, %v870
          %v872 = vsub.f32 1.5, %v871
          %v873 = vmul.f32 %v868, %v872
          %vm874 = vweird.f32 %v866
          %vm875 = vweird.f32 %v868
          %vm876 = vmor %vm874, %vm875
          %v877 = vsel %vm876, %v868, %v873
          %v878 = vrsqrt.pop %v867
          %v879 = vmul.f32 %v878, %v867
          %v880 = vmul.f32 %v879, %v878
          %v881 = vmul.f32 0.5, %v880
          %v882 = vsub.f32 1.5, %v881
          %v883 = vmul.f32 %v878, %v882
          %vm884 = vweird.f32 %v867
          %vm885 = vweird.f32 %v878
          %vm886 = vmor %vm884, %vm885
          %v887 = vsel %vm886, %v878, %v883
          %v888 = vmul.f32 %v854, %v877
          %v889 = vmul.f32 %v855, %v887
          %v891 = vperm.slane %v836, 0
          %v893 = vmul.f32 %v888, %v891
          %v894 = vmul.f32 %v889, %v891
          %v896 = vperm.slane %v837, 0
          %v898 = vadd.f32 %v893, %v896
          %v899 = vadd.f32 %v894, %v896
          %900 = vst.msk [vmem:[#allocation2] sm:$0xff] %vm838, %v898
          %901 = vst.msk [vmem:[#allocation2 + $0x8] sm:$0xff] %vm838, %v899
        $region108: #{tpu_custom_call.1} parent=83 // pred_fallthru
          _
        %v902 = vld [vmem:[#allocation2] sm:$0xff]
        %v903 = vld [vmem:[#allocation2 + $0x8] sm:$0xff]
        %v904 = vld [vmem:[%s658] sm:$0x1]
        %v905 = vld [vmem:[%s800] sm:$0xf]
        %v906 = vld [vmem:[%s800 + $0x4] sm:$0xf]
        %v907 = vld [vmem:[%s800 + $0x8] sm:$0xf]
        %v908 = vld [vmem:[%s800 + $0xc] sm:$0xf]
        %v909 = vld [vmem:[%s808] sm:$0xf]
        %v910 = vld [vmem:[%s808 + $0x4] sm:$0xf]
        %v911 = vld [vmem:[%s808 + $0x8] sm:$0xf]
        %v912 = vld [vmem:[%s808 + $0xc] sm:$0xf]
        %v913 = vpack.c.bf16 %v903, %v902
        %v914 = vld [vmem:[%s803] sm:$0x1]
        %v916 = vperm.slane %v914, 0
        %v922 = vunpack.c.l.b16 %v905
        %v923 = vunpack.c.l.b16 %v906
        %v924 = vunpack.c.l.b16 %v907
        %v925 = vunpack.c.l.b16 %v908
        %v926 = vpack.c.b16 %v923, %v922
        %v927 = vpack.c.b16 %v925, %v924
        %vm930 = vcmask 261120
        %v932 = vsel %vm930, %v913, 0
        %934 = vmatpush.bf16.msra.mxu0 0
        %935 = vmatpush.bf16.msra.mxu0 0
        %936 = vmatpush.bf16.msra.mxu0 0
        %937 = vmatpush.bf16.msra.mxu0 0
        %938 = vmatpush.bf16.msra.mxu0 0
        %939 = vmatpush.bf16.msra.mxu0 0
        %940 = vmatpush.bf16.msra.mxu0 %v927
        %941 = vmatpush.bf16.msra.mxu0 %v926
        %942 = vmatmul.bf16.gmra.mxu0 %v932
        %v943 = vpop.f32.mrf.mxu0
        %v944 = vadd.f32 %v916, %v943
        %v945 = vpop.f32.mrf.mxu0
        %v946 = vadd.f32 %v916, %v945
        %947 = vdwg.mxu0
        %950 = vrot.lane.b32.xlu0 %v944, 96
        %v951 = vpop.permute.xlu0 %950
        %952 = vrot.lane.b32.xlu0 %v946, 96
        %v953 = vpop.permute.xlu0 %952
        %vm954 = vcmask 64512
        %v955 = vsel %vm954, %v944, 0
        %v957 = vsel %vm954, %v946, 0
        %v959 = vsel %vm954, %v951, 0
        %v961 = vsel %vm954, %v953, 0
        %963 = vmatpush.xpose.msra.mxu0 0.0
        %964 = vmatpush.xpose.msra.mxu0 0.0
        %965 = vmatpush.xpose.msra.mxu0 0.0
        %966 = vmatpush.xpose.msra.mxu0 0.0
        %967 = vmatpush.xpose.msra.mxu0 0.0
        %968 = vmatpush.xpose.msra.mxu0 0.0
        %969 = vmatpush.xpose.msra.mxu0 0.0
        %970 = vmatpush.xpose.msra.mxu0 0.0
        %971 = vmatpush.xpose.msra.mxu0 0.0
        %972 = vmatpush.xpose.msra.mxu0 0.0
        %973 = vmatpush.xpose.msra.mxu0 0.0
        %974 = vmatpush.xpose.msra.mxu0 0.0
        %975 = vmatpush.xpose.msra.mxu0 0.0
        %976 = vmatpush.xpose.msra.mxu0 0.0
        %977 = vmatpush.xpose.msra.mxu0 %v961
        %978 = vmatpush.xpose.msra.mxu0 %v959
        %979 = vmatmul.f32.gmra.mxu0 %v955
        %v980 = vpop.f32.mrf.mxu0
        %v981 = vadd.f32 0.0, %v980
        %982 = vmatmul.f32.gmra.mxu0 %v957
        %v983 = vpop.f32.mrf.mxu0
        %v984 = vadd.f32 0.0, %v983
        %985 = vdwg.mxu0
        %v986 = vmul.f32 %v981, 0.35355338
        %v987 = vmul.f32 %v984, 0.35355338
        %v989 = vperm.slane %v904, 0
        %v991 = vadd.f32 %v986, %v989
        %v992 = vadd.f32 %v987, %v989
        %vm993 = vcmask 130048
        %v994 = vsel %vm993, %v991, -inf
        %995 = vmax.xlane.f32.xlu0 %v994
        %v996 = vpop.xlane.xlu0 %995
        %v997 = vsel %vm993, %v992, -inf
        %998 = vmax.xlane.f32.xlu0 %v997
        %v999 = vpop.xlane.xlu0 %998
        %v1000 = vsub.f32 %v991, %v996
        %v1001 = vsub.f32 %v992, %v999
        %v1002 = vmul.f32 %v1000, 1.442695
        %v1003 = vpow.pop %v1002
        %v1004 = vmul.f32 %v1001, 1.442695
        %v1005 = vpow.pop %v1004
        %v1006 = vsel %vm993, %v1003, 0.0
        %1007 = vadd.xlane.f32.xlu0 %v1006
        %v1008 = vpop.xlane.xlu0 %1007
        %v1009 = vsel %vm993, %v1005, 0.0
        %1010 = vadd.xlane.f32.xlu0 %v1009
        %v1011 = vpop.xlane.xlu0 %1010
        %v1012 = vrcp.pop %v1008
        %v1013 = vrcp.pop %v1011
        %v1014 = vmul.f32 %v1003, %v1012
        %v1015 = vmul.f32 %v1005, %v1013
        %v1016 = vpack.c.bf16 %v1015, %v1014
        %v1017 = vpack.c.bf16 %v946, %v944
        %1019 = vrot.lane.b32.xlu0 %v1017, 64
        %v1020 = vpop.permute.xlu0 %1019
        %v1023 = vsel %vm993, %v1016, 0
        %1025 = vmatpush.bf16.msra.mxu0 0
        %1026 = vmatpush.bf16.msra.mxu0 0
        %1027 = vmatpush.bf16.msra.mxu0 0
        %1028 = vmatpush.bf16.msra.mxu0 0
        %1029 = vmatpush.bf16.msra.mxu0 0
        %1030 = vmatpush.bf16.msra.mxu0 0
        %1031 = vmatpush.bf16.msra.mxu0 0
        %1032 = vmatpush.bf16.msra.mxu0 %v1020
        %1033 = vmatmul.bf16.gmra.mxu0 %v1023
        %v1034 = vpop.f32.mrf.mxu0
        %v1035 = vadd.f32 0.0, %v1034
        %v1036 = vpop.f32.mrf.mxu0
        %v1037 = vadd.f32 0.0, %v1036
        %1038 = vdwg.mxu0
        %v1039 = vpack.c.bf16 %v1037, %v1035
        %1040 = vrot.lane.b32.xlu0 %v944, 120
        %v1041 = vpop.permute.xlu0 %1040
        %1042 = vrot.lane.b32.xlu0 %v946, 120
        %v1043 = vpop.permute.xlu0 %1042
        %1044 = vrot.lane.b32.xlu0 %v944, 88
        %v1045 = vpop.permute.xlu0 %1044
        %1046 = vrot.lane.b32.xlu0 %v946, 88
        %v1047 = vpop.permute.xlu0 %1046
        %v1048 = vsel %vm954, %v1041, 0
        %v1050 = vsel %vm954, %v1043, 0
        %v1052 = vsel %vm954, %v1045, 0
        %v1054 = vsel %vm954, %v1047, 0
        %1056 = vmatpush.xpose.msra.mxu0 0.0
        %1057 = vmatpush.xpose.msra.mxu0 0.0
        %1058 = vmatpush.xpose.msra.mxu0 0.0
        %1059 = vmatpush.xpose.msra.mxu0 0.0
        %1060 = vmatpush.xpose.msra.mxu0 0.0
        %1061 = vmatpush.xpose.msra.mxu0 0.0
        %1062 = vmatpush.xpose.msra.mxu0 0.0
        %1063 = vmatpush.xpose.msra.mxu0 0.0
        %1064 = vmatpush.xpose.msra.mxu0 0.0
        %1065 = vmatpush.xpose.msra.mxu0 0.0
        %1066 = vmatpush.xpose.msra.mxu0 0.0
        %1067 = vmatpush.xpose.msra.mxu0 0.0
        %1068 = vmatpush.xpose.msra.mxu0 0.0
        %1069 = vmatpush.xpose.msra.mxu0 0.0
        %1070 = vmatpush.xpose.msra.mxu0 %v1054
        %1071 = vmatpush.xpose.msra.mxu0 %v1052
        %1072 = vmatmul.f32.gmra.mxu0 %v1048
        %v1073 = vpop.f32.mrf.mxu0
        %v1074 = vadd.f32 0.0, %v1073
        %1075 = vmatmul.f32.gmra.mxu0 %v1050
        %v1076 = vpop.f32.mrf.mxu0
        %v1077 = vadd.f32 0.0, %v1076
        %1078 = vdwg.mxu0
        %v1079 = vmul.f32 %v1074, 0.35355338
        %v1080 = vmul.f32 %v1077, 0.35355338
        %v1081 = vadd.f32 %v1079, %v989
        %v1082 = vadd.f32 %v1080, %v989
        %v1083 = vsel %vm993, %v1081, -inf
        %1084 = vmax.xlane.f32.xlu0 %v1083
        %v1085 = vpop.xlane.xlu0 %1084
        %v1086 = vsel %vm993, %v1082, -inf
        %1087 = vmax.xlane.f32.xlu0 %v1086
        %v1088 = vpop.xlane.xlu0 %1087
        %v1089 = vsub.f32 %v1081, %v1085
        %v1090 = vsub.f32 %v1082, %v1088
        %v1091 = vmul.f32 %v1089, 1.442695
        %v1092 = vpow.pop %v1091
        %v1093 = vmul.f32 %v1090, 1.442695
        %v1094 = vpow.pop %v1093
        %v1095 = vsel %vm993, %v1092, 0.0
        %1096 = vadd.xlane.f32.xlu0 %v1095
        %v1097 = vpop.xlane.xlu0 %1096
        %v1098 = vsel %vm993, %v1094, 0.0
        %1099 = vadd.xlane.f32.xlu0 %v1098
        %v1100 = vpop.xlane.xlu0 %1099
        %v1101 = vrcp.pop %v1097
        %v1102 = vrcp.pop %v1100
        %v1103 = vmul.f32 %v1092, %v1101
        %v1104 = vmul.f32 %v1094, %v1102
        %v1105 = vpack.c.bf16 %v1104, %v1103
        %1106 = vrot.lane.b32.xlu0 %v1017, 56
        %v1107 = vpop.permute.xlu0 %1106
        %v1110 = vsel %vm993, %v1105, 0
        %1112 = vmatpush.bf16.msra.mxu0 0
        %1113 = vmatpush.bf16.msra.mxu0 0
        %1114 = vmatpush.bf16.msra.mxu0 0
        %1115 = vmatpush.bf16.msra.mxu0 0
        %1116 = vmatpush.bf16.msra.mxu0 0
        %1117 = vmatpush.bf16.msra.mxu0 0
        %1118 = vmatpush.bf16.msra.mxu0 0
        %1119 = vmatpush.bf16.msra.mxu0 %v1107
        %1120 = vmatmul.bf16.gmra.mxu0 %v1110
        %v1121 = vpop.f32.mrf.mxu0
        %v1122 = vadd.f32 0.0, %v1121
        %v1123 = vpop.f32.mrf.mxu0
        %v1124 = vadd.f32 0.0, %v1123
        %1125 = vdwg.mxu0
        %v1126 = vpack.c.bf16 %v1124, %v1122
        %v1128 = vsel %vm954, %v1126, 0
        %vm1130 = vcmask 1043456
        %v1132 = vsel %vm1130, %v910, 0
        %1134 = vmatpush.bf16.msra.mxu0 0
        %1135 = vmatpush.bf16.msra.mxu0 0
        %1136 = vmatpush.bf16.msra.mxu0 0
        %1137 = vmatpush.bf16.msra.mxu0 0
        %1138 = vmatpush.bf16.msra.mxu0 0
        %1139 = vmatpush.bf16.msra.mxu0 0
        %1140 = vmatpush.bf16.msra.mxu0 0
        %1141 = vmatpush.bf16.msra.mxu0 %v1132
        %1142 = vmatmul.bf16.gmra.mxu0 %v1128
        %v1143 = vpop.f32.mrf.mxu0
        %v1144 = vadd.f32 0.0, %v1143
        %v1145 = vpop.f32.mrf.mxu0
        %v1146 = vadd.f32 0.0, %v1145
        %1147 = vdwg.mxu0
        %v1149 = vsel %vm954, %v1039, 0
        %v1152 = vsel %vm1130, %v909, 0
        %1154 = vmatpush.bf16.msra.mxu0 0
        %1155 = vmatpush.bf16.msra.mxu0 0
        %1156 = vmatpush.bf16.msra.mxu0 0
        %1157 = vmatpush.bf16.msra.mxu0 0
        %1158 = vmatpush.bf16.msra.mxu0 0
        %1159 = vmatpush.bf16.msra.mxu0 0
        %1160 = vmatpush.bf16.msra.mxu0 0
        %1161 = vmatpush.bf16.msra.mxu0 %v1152
        %1162 = vmatmul.bf16.gmra.mxu0 %v1149
        %v1163 = vpop.f32.mrf.mxu0
        %v1164 = vadd.f32 %v1144, %v1163
        %v1165 = vpop.f32.mrf.mxu0
        %v1166 = vadd.f32 %v1146, %v1165
        %1167 = vdwg.mxu0
        %1168 = vrot.lane.b32.xlu0 %v944, 112
        %v1169 = vpop.permute.xlu0 %1168
        %1170 = vrot.lane.b32.xlu0 %v946, 112
        %v1171 = vpop.permute.xlu0 %1170
        %1172 = vrot.lane.b32.xlu0 %v944, 80
        %v1173 = vpop.permute.xlu0 %1172
        %1174 = vrot.lane.b32.xlu0 %v946, 80
        %v1175 = vpop.permute.xlu0 %1174
        %v1176 = vsel %vm954, %v1169, 0
        %v1178 = vsel %vm954, %v1171, 0
        %v1180 = vsel %vm954, %v1173, 0
        %v1182 = vsel %vm954, %v1175, 0
        %1184 = vmatpush.xpose.msra.mxu0 0.0
        %1185 = vmatpush.xpose.msra.mxu0 0.0
        %1186 = vmatpush.xpose.msra.mxu0 0.0
        %1187 = vmatpush.xpose.msra.mxu0 0.0
        %1188 = vmatpush.xpose.msra.mxu0 0.0
        %1189 = vmatpush.xpose.msra.mxu0 0.0
        %1190 = vmatpush.xpose.msra.mxu0 0.0
        %1191 = vmatpush.xpose.msra.mxu0 0.0
        %1192 = vmatpush.xpose.msra.mxu0 0.0
        %1193 = vmatpush.xpose.msra.mxu0 0.0
        %1194 = vmatpush.xpose.msra.mxu0 0.0
        %1195 = vmatpush.xpose.msra.mxu0 0.0
        %1196 = vmatpush.xpose.msra.mxu0 0.0
        %1197 = vmatpush.xpose.msra.mxu0 0.0
        %1198 = vmatpush.xpose.msra.mxu0 %v1182
        %1199 = vmatpush.xpose.msra.mxu0 %v1180
        %1200 = vmatmul.f32.gmra.mxu0 %v1176
        %v1201 = vpop.f32.mrf.mxu0
        %v1202 = vadd.f32 0.0, %v1201
        %1203 = vmatmul.f32.gmra.mxu0 %v1178
        %v1204 = vpop.f32.mrf.mxu0
        %v1205 = vadd.f32 0.0, %v1204
        %1206 = vdwg.mxu0
        %v1207 = vmul.f32 %v1202, 0.35355338
        %v1208 = vmul.f32 %v1205, 0.35355338
        %v1209 = vadd.f32 %v1207, %v989
        %v1210 = vadd.f32 %v1208, %v989
        %v1211 = vsel %vm993, %v1209, -inf
        %1212 = vmax.xlane.f32.xlu0 %v1211
        %v1213 = vpop.xlane.xlu0 %1212
        %v1214 = vsel %vm993, %v1210, -inf
        %1215 = vmax.xlane.f32.xlu0 %v1214
        %v1216 = vpop.xlane.xlu0 %1215
        %v1217 = vsub.f32 %v1209, %v1213
        %v1218 = vsub.f32 %v1210, %v1216
        %v1219 = vmul.f32 %v1217, 1.442695
        %v1220 = vpow.pop %v1219
        %v1221 = vmul.f32 %v1218, 1.442695
        %v1222 = vpow.pop %v1221
        %v1223 = vsel %vm993, %v1220, 0.0
        %1224 = vadd.xlane.f32.xlu0 %v1223
        %v1225 = vpop.xlane.xlu0 %1224
        %v1226 = vsel %vm993, %v1222, 0.0
        %1227 = vadd.xlane.f32.xlu0 %v1226
        %v1228 = vpop.xlane.xlu0 %1227
        %v1229 = vrcp.pop %v1225
        %v1230 = vrcp.pop %v1228
        %v1231 = vmul.f32 %v1220, %v1229
        %v1232 = vmul.f32 %v1222, %v1230
        %v1233 = vpack.c.bf16 %v1232, %v1231
        %1234 = vrot.lane.b32.xlu0 %v1017, 48
        %v1235 = vpop.permute.xlu0 %1234
        %v1238 = vsel %vm993, %v1233, 0
        %1240 = vmatpush.bf16.msra.mxu0 0
        %1241 = vmatpush.bf16.msra.mxu0 0
        %1242 = vmatpush.bf16.msra.mxu0 0
        %1243 = vmatpush.bf16.msra.mxu0 0
        %1244 = vmatpush.bf16.msra.mxu0 0
        %1245 = vmatpush.bf16.msra.mxu0 0
        %1246 = vmatpush.bf16.msra.mxu0 0
        %1247 = vmatpush.bf16.msra.mxu0 %v1235
        %1248 = vmatmul.bf16.gmra.mxu0 %v1238
        %v1249 = vpop.f32.mrf.mxu0
        %v1250 = vadd.f32 0.0, %v1249
        %v1251 = vpop.f32.mrf.mxu0
        %v1252 = vadd.f32 0.0, %v1251
        %1253 = vdwg.mxu0
        %v1254 = vpack.c.bf16 %v1252, %v1250
        %v1256 = vsel %vm954, %v1254, 0
        %v1259 = vsel %vm1130, %v911, 0
        %1261 = vmatpush.bf16.msra.mxu0 0
        %1262 = vmatpush.bf16.msra.mxu0 0
        %1263 = vmatpush.bf16.msra.mxu0 0
        %1264 = vmatpush.bf16.msra.mxu0 0
        %1265 = vmatpush.bf16.msra.mxu0 0
        %1266 = vmatpush.bf16.msra.mxu0 0
        %1267 = vmatpush.bf16.msra.mxu0 0
        %1268 = vmatpush.bf16.msra.mxu0 %v1259
        %1269 = vmatmul.bf16.gmra.mxu0 %v1256
        %v1270 = vpop.f32.mrf.mxu0
        %v1271 = vadd.f32 0.0, %v1270
        %v1272 = vpop.f32.mrf.mxu0
        %v1273 = vadd.f32 0.0, %v1272
        %1274 = vdwg.mxu0
        %v1275 = vadd.f32 %v1164, %v1271
        %v1276 = vadd.f32 %v1166, %v1273
        %1277 = vrot.lane.b32.xlu0 %v944, 104
        %v1278 = vpop.permute.xlu0 %1277
        %1279 = vrot.lane.b32.xlu0 %v946, 104
        %v1280 = vpop.permute.xlu0 %1279
        %1281 = vrot.lane.b32.xlu0 %v944, 72
        %v1282 = vpop.permute.xlu0 %1281
        %1283 = vrot.lane.b32.xlu0 %v946, 72
        %v1284 = vpop.permute.xlu0 %1283
        %v1285 = vsel %vm954, %v1278, 0
        %v1287 = vsel %vm954, %v1280, 0
        %v1289 = vsel %vm954, %v1282, 0
        %v1291 = vsel %vm954, %v1284, 0
        %1293 = vmatpush.xpose.msra.mxu0 0.0
        %1294 = vmatpush.xpose.msra.mxu0 0.0
        %1295 = vmatpush.xpose.msra.mxu0 0.0
        %1296 = vmatpush.xpose.msra.mxu0 0.0
        %1297 = vmatpush.xpose.msra.mxu0 0.0
        %1298 = vmatpush.xpose.msra.mxu0 0.0
        %1299 = vmatpush.xpose.msra.mxu0 0.0
        %1300 = vmatpush.xpose.msra.mxu0 0.0
        %1301 = vmatpush.xpose.msra.mxu0 0.0
        %1302 = vmatpush.xpose.msra.mxu0 0.0
        %1303 = vmatpush.xpose.msra.mxu0 0.0
        %1304 = vmatpush.xpose.msra.mxu0 0.0
        %1305 = vmatpush.xpose.msra.mxu0 0.0
        %1306 = vmatpush.xpose.msra.mxu0 0.0
        %1307 = vmatpush.xpose.msra.mxu0 %v1291
        %1308 = vmatpush.xpose.msra.mxu0 %v1289
        %1309 = vmatmul.f32.gmra.mxu0 %v1285
        %v1310 = vpop.f32.mrf.mxu0
        %v1311 = vadd.f32 0.0, %v1310
        %1312 = vmatmul.f32.gmra.mxu0 %v1287
        %v1313 = vpop.f32.mrf.mxu0
        %v1314 = vadd.f32 0.0, %v1313
        %1315 = vdwg.mxu0
        %v1316 = vmul.f32 %v1311, 0.35355338
        %v1317 = vmul.f32 %v1314, 0.35355338
        %v1318 = vadd.f32 %v1316, %v989
        %v1319 = vadd.f32 %v1317, %v989
        %v1320 = vsel %vm993, %v1318, -inf
        %1321 = vmax.xlane.f32.xlu0 %v1320
        %v1322 = vpop.xlane.xlu0 %1321
        %v1323 = vsel %vm993, %v1319, -inf
        %1324 = vmax.xlane.f32.xlu0 %v1323
        %v1325 = vpop.xlane.xlu0 %1324
        %v1326 = vsub.f32 %v1318, %v1322
        %v1327 = vsub.f32 %v1319, %v1325
        %v1328 = vmul.f32 %v1326, 1.442695
        %v1329 = vpow.pop %v1328
        %v1330 = vmul.f32 %v1327, 1.442695
        %v1331 = vpow.pop %v1330
        %v1332 = vsel %vm993, %v1329, 0.0
        %1333 = vadd.xlane.f32.xlu0 %v1332
        %v1334 = vpop.xlane.xlu0 %1333
        %v1335 = vsel %vm993, %v1331, 0.0
        %1336 = vadd.xlane.f32.xlu0 %v1335
        %v1337 = vpop.xlane.xlu0 %1336
        %v1338 = vrcp.pop %v1334
        %v1339 = vrcp.pop %v1337
        %v1340 = vmul.f32 %v1329, %v1338
        %v1341 = vmul.f32 %v1331, %v1339
        %v1342 = vpack.c.bf16 %v1341, %v1340
        %1343 = vrot.lane.b32.xlu0 %v1017, 40
        %v1344 = vpop.permute.xlu0 %1343
        %v1347 = vsel %vm993, %v1342, 0
        %1349 = vmatpush.bf16.msra.mxu0 0
        %1350 = vmatpush.bf16.msra.mxu0 0
        %1351 = vmatpush.bf16.msra.mxu0 0
        %1352 = vmatpush.bf16.msra.mxu0 0
        %1353 = vmatpush.bf16.msra.mxu0 0
        %1354 = vmatpush.bf16.msra.mxu0 0
        %1355 = vmatpush.bf16.msra.mxu0 0
        %1356 = vmatpush.bf16.msra.mxu0 %v1344
        %1357 = vmatmul.bf16.gmra.mxu0 %v1347
        %v1358 = vpop.f32.mrf.mxu0
        %v1359 = vadd.f32 0.0, %v1358
        %v1360 = vpop.f32.mrf.mxu0
        %v1361 = vadd.f32 0.0, %v1360
        %1362 = vdwg.mxu0
        %v1363 = vpack.c.bf16 %v1361, %v1359
        %v1365 = vsel %vm954, %v1363, 0
        %v1368 = vsel %vm1130, %v912, 0
        %1370 = vmatpush.bf16.msra.mxu0 0
        %1371 = vmatpush.bf16.msra.mxu0 0
        %1372 = vmatpush.bf16.msra.mxu0 0
        %1373 = vmatpush.bf16.msra.mxu0 0
        %1374 = vmatpush.bf16.msra.mxu0 0
        %1375 = vmatpush.bf16.msra.mxu0 0
        %1376 = vmatpush.bf16.msra.mxu0 0
        %1377 = vmatpush.bf16.msra.mxu0 %v1368
        %1378 = vmatmul.bf16.gmra.mxu0 %v1365
        %v1379 = vpop.f32.mrf.mxu0
        %v1380 = vadd.f32 0.0, %v1379
        %v1381 = vpop.f32.mrf.mxu0
        %v1382 = vadd.f32 0.0, %v1381
        %1383 = vdwg.mxu0
        %v1384 = vadd.f32 %v1275, %v1380
        %v1385 = vadd.f32 %v1276, %v1382
        %v1386 = vld [vmem:[%s811] sm:$0x1]
        %v1388 = vperm.slane %v1386, 0
        %v1390 = vadd.f32 %v1384, %v1388
        %v1391 = vadd.f32 %v1385, %v1388
        %v1392 = vadd.f32 %v902, %v1390
        %v1393 = vadd.f32 %v903, %v1391
        %v1394 = vld [vmem:[%s814] sm:$0x1]
        %v1395 = vld [vmem:[%s672] sm:$0x1]
        %v1396 = vsel %vm930, %v1392, 0.0
        %1397 = vadd.xlane.f32.xlu0 %v1396
        %v1398 = vpop.xlane.xlu0 %1397
        %v1399 = vsel %vm930, %v1393, 0.0
        %1400 = vadd.xlane.f32.xlu0 %v1399
        %v1401 = vpop.xlane.xlu0 %1400
        %v1402 = vrcp.pop 32.0
        %v1403 = vmul.f32 32.0, %v1402
        %v1404 = vsub.f32 1.0, %v1403
        %v1405 = vmul.f32 %v1402, %v1404
        %v1406 = vadd.f32 %v1402, %v1405
        %vm1407 = vweird.f32 %v1402
        %v1408 = vsel %vm1407, %v1402, %v1406
        %v1409 = vmul.f32 %v1398, %v1408
        %v1410 = vmul.f32 %v1401, %v1408
        %v1411 = vsub.f32 %v1392, %v1409
        %v1412 = vsub.f32 %v1393, %v1410
        %v1413 = vmul.f32 %v1411, %v1411
        %v1414 = vmul.f32 %v1412, %v1412
        %v1415 = vsel %vm930, %v1413, 0.0
        %1416 = vadd.xlane.f32.xlu0 %v1415
        %v1417 = vpop.xlane.xlu0 %1416
        %v1418 = vsel %vm930, %v1414, 0.0
        %1419 = vadd.xlane.f32.xlu0 %v1418
        %v1420 = vpop.xlane.xlu0 %1419
        %v1421 = vmul.f32 %v1417, %v1408
        %v1422 = vmul.f32 %v1420, %v1408
        %v1423 = vadd.f32 %v1421, 1e-05
        %v1424 = vadd.f32 %v1422, 1e-05
        %v1425 = vrsqrt.pop %v1423
        %v1426 = vmul.f32 %v1425, %v1423
        %v1427 = vmul.f32 %v1426, %v1425
        %v1428 = vmul.f32 0.5, %v1427
        %v1429 = vsub.f32 1.5, %v1428
        %v1430 = vmul.f32 %v1425, %v1429
        %vm1431 = vweird.f32 %v1423
        %vm1432 = vweird.f32 %v1425
        %vm1433 = vmor %vm1431, %vm1432
        %v1434 = vsel %vm1433, %v1425, %v1430
        %v1435 = vrsqrt.pop %v1424
        %v1436 = vmul.f32 %v1435, %v1424
        %v1437 = vmul.f32 %v1436, %v1435
        %v1438 = vmul.f32 0.5, %v1437
        %v1439 = vsub.f32 1.5, %v1438
        %v1440 = vmul.f32 %v1435, %v1439
        %vm1441 = vweird.f32 %v1424
        %vm1442 = vweird.f32 %v1435
        %vm1443 = vmor %vm1441, %vm1442
        %v1444 = vsel %vm1443, %v1435, %v1440
        %v1445 = vmul.f32 %v1411, %v1434
        %v1446 = vmul.f32 %v1412, %v1444
        %v1448 = vperm.slane %v1394, 0
        %v1450 = vmul.f32 %v1445, %v1448
        %v1451 = vmul.f32 %v1446, %v1448
        %v1453 = vperm.slane %v1395, 0
        %v1455 = vadd.f32 %v1450, %v1453
        %v1456 = vadd.f32 %v1451, %v1453
        %v1457 = vpack.c.bf16 %v1456, %v1455
        %v1458 = vld [vmem:[%s682] sm:$0xf]
        %v1459 = vld [vmem:[%s682 + $0x4] sm:$0xf]
        %v1460 = vld [vmem:[%s682 + $0x8] sm:$0xf]
        %v1461 = vld [vmem:[%s682 + $0xc] sm:$0xf]
        %v1462 = vld [vmem:[%s817] sm:$0x1]
        %v1464 = vperm.slane %v1462, 0
        %v1470 = vunpack.c.l.b16 %v1458
        %v1471 = vunpack.c.l.b16 %v1459
        %v1472 = vunpack.c.l.b16 %v1460
        %v1473 = vunpack.c.l.b16 %v1461
        %v1474 = vpack.c.b16 %v1471, %v1470
        %v1475 = vpack.c.b16 %v1473, %v1472
        %v1479 = vsel %vm930, %v1457, 0
        %1481 = vmatpush.bf16.msra.mxu0 0
        %1482 = vmatpush.bf16.msra.mxu0 0
        %1483 = vmatpush.bf16.msra.mxu0 0
        %1484 = vmatpush.bf16.msra.mxu0 0
        %1485 = vmatpush.bf16.msra.mxu0 0
        %1486 = vmatpush.bf16.msra.mxu0 0
        %1487 = vmatpush.bf16.msra.mxu0 %v1475
        %1488 = vmatpush.bf16.msra.mxu0 %v1474
        %1489 = vmatmul.bf16.gmra.mxu0 %v1479
        %v1490 = vpop.f32.mrf.mxu0
        %v1491 = vadd.f32 %v1464, %v1490
        %v1492 = vpop.f32.mrf.mxu0
        %v1493 = vadd.f32 %v1464, %v1492
        %1494 = vdwg.mxu0
        %v1495 = vmul.f32 %v1491, 0.5
        %v1496 = vmul.f32 %v1493, 0.5
        %v1497 = vmul.f32 %v1491, 0.70710677
        %v1498 = vmul.f32 %v1493, 0.70710677
        %v1499 = vmul.f32 %v1497, %v1497
        %v1500 = vmin.f32 16.0, %v1499
        %v1501 = vmul.f32 %v1500, 2.1237322e-06
        %v1502 = vadd.f32 %v1501, 0.00028619796
        %v1503 = vmul.f32 %v1500, %v1502
        %v1504 = vadd.f32 %v1503, 0.0036580483
        %v1505 = vmul.f32 %v1500, %v1504
        %v1506 = vadd.f32 %v1505, 0.05243302
        %v1507 = vmul.f32 %v1500, %v1506
        %v1508 = vadd.f32 %v1507, 0.18741608
        %v1509 = vmul.f32 %v1500, %v1508
        %v1510 = vadd.f32 %v1509, 1.1283791
        %v1511 = vmul.f32 %v1497, %v1510
        %v1512 = vmul.f32 %v1500, 3.8918573e-05
        %v1513 = vadd.f32 %v1512, 0.001143296
        %v1514 = vmul.f32 %v1500, %v1513
        %v1515 = vadd.f32 %v1514, 0.014752088
        %v1516 = vmul.f32 %v1500, %v1515
        %v1517 = vadd.f32 %v1516, 0.112945676
        %v1518 = vmul.f32 %v1500, %v1517
        %v1519 = vadd.f32 %v1518, 0.4994258
        %v1520 = vmul.f32 %v1500, %v1519
        %v1521 = vadd.f32 %v1520, 1.0
        %v1522 = vrcp.pop %v1521
        %v1523 = vmul.f32 %v1521, %v1522
        %v1524 = vsub.f32 1.0, %v1523
        %v1525 = vmul.f32 %v1522, %v1524
        %v1526 = vadd.f32 %v1522, %v1525
        %vm1527 = vweird.f32 %v1521
        %vm1528 = vweird.f32 %v1522
        %vm1529 = vmor %vm1527, %vm1528
        %v1530 = vsel %vm1529, %v1522, %v1526
        %v1531 = vand.u32 2147483647, %v1521
        %vm1532 = vcmp.eq.f32.partialorder %v1531, 8.507059e+37
        %v1533 = vand.u32 %v1521, 2147483648
        %v1534 = vor.u32 1.1754944e-38, %v1533
        %v1535 = vsel %vm1532, %v1534, %v1530
        %v1536 = vmul.f32 %v1511, %v1535
        %v1537 = vmin.f32 %v1536, 1.0
        %v1538 = vmax.f32 %v1537, -1.0
        %v1539 = vmul.f32 %v1498, %v1498
        %v1540 = vmin.f32 16.0, %v1539
        %v1541 = vmul.f32 %v1540, 2.1237322e-06
        %v1542 = vadd.f32 %v1541, 0.00028619796
        %v1543 = vmul.f32 %v1540, %v1542
        %v1544 = vadd.f32 %v1543, 0.0036580483
        %v1545 = vmul.f32 %v1540, %v1544
        %v1546 = vadd.f32 %v1545, 0.05243302
        %v1547 = vmul.f32 %v1540, %v1546
        %v1548 = vadd.f32 %v1547, 0.18741608
        %v1549 = vmul.f32 %v1540, %v1548
        %v1550 = vadd.f32 %v1549, 1.1283791
        %v1551 = vmul.f32 %v1498, %v1550
        %v1552 = vmul.f32 %v1540, 3.8918573e-05
        %v1553 = vadd.f32 %v1552, 0.001143296
        %v1554 = vmul.f32 %v1540, %v1553
        %v1555 = vadd.f32 %v1554, 0.014752088
        %v1556 = vmul.f32 %v1540, %v1555
        %v1557 = vadd.f32 %v1556, 0.112945676
        %v1558 = vmul.f32 %v1540, %v1557
        %v1559 = vadd.f32 %v1558, 0.4994258
        %v1560 = vmul.f32 %v1540, %v1559
        %v1561 = vadd.f32 %v1560, 1.0
        %v1562 = vrcp.pop %v1561
        %v1563 = vmul.f32 %v1561, %v1562
        %v1564 = vsub.f32 1.0, %v1563
        %v1565 = vmul.f32 %v1562, %v1564
        %v1566 = vadd.f32 %v1562, %v1565
        %vm1567 = vweird.f32 %v1561
        %vm1568 = vweird.f32 %v1562
        %vm1569 = vmor %vm1567, %vm1568
        %v1570 = vsel %vm1569, %v1562, %v1566
        %v1571 = vand.u32 2147483647, %v1561
        %vm1572 = vcmp.eq.f32.partialorder %v1571, 8.507059e+37
        %v1573 = vand.u32 %v1561, 2147483648
        %v1574 = vor.u32 1.1754944e-38, %v1573
        %v1575 = vsel %vm1572, %v1574, %v1570
        %v1576 = vmul.f32 %v1551, %v1575
        %v1577 = vmin.f32 %v1576, 1.0
        %v1578 = vmax.f32 %v1577, -1.0
        %v1579 = vadd.f32 %v1538, 1.0
        %v1580 = vadd.f32 %v1578, 1.0
        %v1581 = vmul.f32 %v1495, %v1579
        %v1582 = vmul.f32 %v1496, %v1580
        %v1583 = vpack.c.bf16 %v1582, %v1581
        %v1584 = vld [vmem:[%s822] sm:$0xf]
        %v1585 = vld [vmem:[%s822 + $0x4] sm:$0xf]
        %v1586 = vld [vmem:[%s822 + $0x8] sm:$0xf]
        %v1587 = vld [vmem:[%s822 + $0xc] sm:$0xf]
        %v1588 = vld [vmem:[%s822 + $0x10] sm:$0xf]
        %v1589 = vld [vmem:[%s822 + $0x14] sm:$0xf]
        %v1590 = vld [vmem:[%s822 + $0x18] sm:$0xf]
        %v1591 = vld [vmem:[%s822 + $0x1c] sm:$0xf]
        %v1592 = vld [vmem:[%s825] sm:$0x1]
        %v1594 = vperm.slane %v1592, 0
        %v1604 = vunpack.c.l.b16 %v1584
        %v1605 = vunpack.c.l.b16 %v1585
        %v1606 = vunpack.c.l.b16 %v1586
        %v1607 = vunpack.c.l.b16 %v1587
        %v1608 = vunpack.c.l.b16 %v1588
        %v1609 = vunpack.c.l.b16 %v1589
        %v1610 = vunpack.c.l.b16 %v1590
        %v1611 = vunpack.c.l.b16 %v1591
        %v1612 = vpack.c.b16 %v1605, %v1604
        %v1613 = vpack.c.b16 %v1607, %v1606
        %v1614 = vpack.c.b16 %v1609, %v1608
        %v1615 = vpack.c.b16 %v1611, %v1610
        %vm1620 = vcmask 523264
        %v1622 = vsel %vm1620, %v1583, 0
        %1624 = vmatpush.bf16.msra.mxu0 0
        %1625 = vmatpush.bf16.msra.mxu0 0
        %1626 = vmatpush.bf16.msra.mxu0 0
        %1627 = vmatpush.bf16.msra.mxu0 0
        %1628 = vmatpush.bf16.msra.mxu0 %v1615
        %1629 = vmatpush.bf16.msra.mxu0 %v1614
        %1630 = vmatpush.bf16.msra.mxu0 %v1613
        %1631 = vmatpush.bf16.msra.mxu0 %v1612
        %1632 = vmatmul.bf16.gmra.mxu0 %v1622
        %v1633 = vpop.f32.mrf.mxu0
        %v1634 = vadd.f32 %v1594, %v1633
        %v1635 = vpop.f32.mrf.mxu0
        %v1636 = vadd.f32 %v1594, %v1635
        %1637 = vdwg.mxu0
        %v1638 = vadd.f32 %v1455, %v1634
        %v1639 = vadd.f32 %v1456, %v1636
        %v1640 = vld [vmem:[%s828] sm:$0x1]
        %v1641 = vld [vmem:[%s691] sm:$0x1]
        %v1642 = vsel %vm930, %v1638, 0.0
        %1643 = vadd.xlane.f32.xlu0 %v1642
        %v1644 = vpop.xlane.xlu0 %1643
        %v1645 = vsel %vm930, %v1639, 0.0
        %1646 = vadd.xlane.f32.xlu0 %v1645
        %v1647 = vpop.xlane.xlu0 %1646
        %v1648 = vmul.f32 %v1644, %v1408
        %v1649 = vmul.f32 %v1647, %v1408
        %v1650 = vsub.f32 %v1638, %v1648
        %v1651 = vsub.f32 %v1639, %v1649
        %v1652 = vmul.f32 %v1650, %v1650
        %v1653 = vmul.f32 %v1651, %v1651
        %v1654 = vsel %vm930, %v1652, 0.0
        %1655 = vadd.xlane.f32.xlu0 %v1654
        %v1656 = vpop.xlane.xlu0 %1655
        %v1657 = vsel %vm930, %v1653, 0.0
        %1658 = vadd.xlane.f32.xlu0 %v1657
        %v1659 = vpop.xlane.xlu0 %1658
        %v1660 = vmul.f32 %v1656, %v1408
        %v1661 = vmul.f32 %v1659, %v1408
        %v1662 = vadd.f32 %v1660, 1e-05
        %v1663 = vadd.f32 %v1661, 1e-05
        %v1664 = vrsqrt.pop %v1662
        %v1665 = vmul.f32 %v1664, %v1662
        %v1666 = vmul.f32 %v1665, %v1664
        %v1667 = vmul.f32 0.5, %v1666
        %v1668 = vsub.f32 1.5, %v1667
        %v1669 = vmul.f32 %v1664, %v1668
        %vm1670 = vweird.f32 %v1662
        %vm1671 = vweird.f32 %v1664
        %vm1672 = vmor %vm1670, %vm1671
        %v1673 = vsel %vm1672, %v1664, %v1669
        %v1674 = vrsqrt.pop %v1663
        %v1675 = vmul.f32 %v1674, %v1663
        %v1676 = vmul.f32 %v1675, %v1674
        %v1677 = vmul.f32 0.5, %v1676
        %v1678 = vsub.f32 1.5, %v1677
        %v1679 = vmul.f32 %v1674, %v1678
        %vm1680 = vweird.f32 %v1663
        %vm1681 = vweird.f32 %v1674
        %vm1682 = vmor %vm1680, %vm1681
        %v1683 = vsel %vm1682, %v1674, %v1679
        %v1684 = vmul.f32 %v1650, %v1673
        %v1685 = vmul.f32 %v1651, %v1683
        %v1687 = vperm.slane %v1640, 0
        %v1689 = vmul.f32 %v1684, %v1687
        %v1690 = vmul.f32 %v1685, %v1687
        %v1692 = vperm.slane %v1641, 0
        %v1694 = vadd.f32 %v1689, %v1692
        %v1695 = vadd.f32 %v1690, %v1692
        %1696 = vst.msk [vmem:[#allocation2] sm:$0xff] %vm930, %v1694
        %1697 = vst.msk [vmem:[#allocation2 + $0x8] sm:$0xff] %vm930, %v1695
        %p1698 = scmp.eq.s32.totalorder %s39, 1
        // Predicated region
        $region109: #{tpu_custom_call.1} parent=83 // pred_check
          %p1699 = pneg %p1698
        $region110: #{tpu_custom_call.1} parent=83 // pred_check_branch
          %1701 = sbr.rel (%p1699) target = $region112
        $region111: #{tpu_custom_call.1} parent=83 // pred_region
          %1702 = vst.msk [vmem:[%s790] sm:$0xff] %vm930, %v1694
          %1703 = vst.msk [vmem:[%s790 + $0x8] sm:$0xff] %vm930, %v1695
        $region112: #{tpu_custom_call.1} parent=83 // pred_fallthru
          _
        %s1704 = sand.u32 %s460, 1
        %s1705 = scalar_lea.sflag [#allocation5], %s1704
        %s1706 = sand.u32 %s460, 1
        %s1707 = smul.addr %s1706, 16
        %s1708 = scalar_lea.vmem [#allocation11], %s1707
        // Predicated region
        $region113: #{tpu_custom_call.1} parent=83 // pred_check
          %p1709 = pneg %p470
        $region114: #{tpu_custom_call.1} parent=83 // pred_check_branch
          %1711 = sbr.rel (%p1709) target = $region116
        $region115: #{tpu_custom_call.1} parent=83 // pred_region
          %1713 = vsyncadd %s1705, 0
          %s1714 = smul.addr %s38, 2
          %s1715 = smul.addr %s1714, 8
          %s1716 = scalar_lea.hbm %s16, %s1715
          %s1717 = sshll.u32 %s1708, 4
          %s1718 = int_to_ptr.vmem [resolvable:$true] %s1717
          %s1719 = sshll.u32 %s1716, 4
          %s1720 = int_to_ptr.hbm [resolvable:$true] %s1719
          %1725 = dma.vmem_to_hbm [thread:$0]  %s1718, 256, %s1720, %s1705, 128, 128, 8
        $region116: #{tpu_custom_call.1} parent=83 // pred_fallthru
          _
      $region84: #{tpu_custom_call.1} parent=5 // pred_fallthru
        _
      %p1726 = scmp.le.s32.totalorder 2, %s29
      // Predicated region
      $region117: #{tpu_custom_call.1} parent=5 // pred_check
        %p1727 = pneg %p1726
      $region118: #{tpu_custom_call.1} parent=5 // pred_check_branch
        %1729 = sbr.rel (%p1727) target = $region120
      $region119: #{tpu_custom_call.1} parent=5 // pred_region
        %s1730 = ssub.s32 %s29, 2
        // Predicated region
        $region121: #{tpu_custom_call.1} parent=119 // pred_check
          %p1731 = pneg %p476
        $region122: #{tpu_custom_call.1} parent=119 // pred_check_branch
          %1733 = sbr.rel (%p1731) target = $region124
        $region123: #{tpu_custom_call.1} parent=119 // pred_region
          %s1734 = sand.u32 %s461, 1
          %s1735 = scalar_lea.sflag [#allocation5], %s1734
          %s1736 = sand.u32 %s461, 1
          %s1737 = smul.addr %s1736, 16
          %s1738 = scalar_lea.vmem [#allocation11], %s1737
          %1740 = dma.done %s1735, 256
        $region124: #{tpu_custom_call.1} parent=119 // pred_fallthru
          _
      $region120: #{tpu_custom_call.1} parent=5 // pred_fallthru
        _
    $region6: #{tpu_custom_call.1} parent=1 // loop_footer
      %s33 = sadd.s32 1, %s29
    $region7: #{tpu_custom_call.1} parent=1 // loop_footer_branch
      %28 = sbr.rel target = $region3
    $region8: #{tpu_custom_call.1} parent=1 // loop_exit
      _
    %1741 = vsyncpa [#allocation4], 1
    %s1742 = scalar_lea.sflag [#allocation4], 1
    %1743 = vsyncpa %s1742, 1
    %1744 = vsyncpa [#allocation7], 1
    %1745 = vsyncpa [#allocation5], 1
    %s1746 = scalar_lea.sflag [#allocation5], 1
    %1747 = vsyncpa %s1746, 1

</llo_original>
